<compile_context>
chip_gen: v7x
topology: tpu7x:2x2x1
jax: 0.10.0
libtpu: 0.0.40
codegen_flags: <defaults>
</compile_context>

<pallas_src>
import functools

import numpy as np
import jax
import jax.numpy as jnp
from jax.experimental import pallas as pl
from jax.experimental.pallas import tpu as pltpu

EPS = 1e-5      # PyTorch BatchNorm2d default eps
LANE = 128      # TPU lane width


def _round_up(x, m):
    return ((x + m - 1) // m) * m


def _vmem_limit_bytes():
    # Per-generation VMEM budget: ~3/4 of physical (v7x ~48 MiB, v5e/v6e ~96 MiB).
    cap = 64 * 1024 * 1024
    try:
        info = pltpu.get_tpu_info()
        cap = int(getattr(info, "vmem_capacity_bytes", cap))
    except Exception:
        pass
    return int(min(cap * 3 // 4, 100 * 1024 * 1024))


# ------------------------------ Pallas kernels --------------------------------

def _conv_stats_kernel(x_main, x_top, x_bot, scale_ref, shift_ref, w_ref,
                       y_ref, stats_ref, slab_ref, col_ref, *, fuse_bn_relu):
    """3x3 conv (padding=1, bias=False) over one (1, tile_h, W, Cin) row tile.

    If fuse_bn_relu: the *input* activation is first normalized with the folded
    BatchNorm affine (v*scale + shift) and ReLU'd (used for conv2, whose input
    is the BN1+ReLU output).  Emits the pre-BN conv output tile (bf16) and
    per-image partial BN statistics (sum, sum-of-squares) accumulated over the
    row-tile grid axis.
    """
    i = pl.program_id(1)
    n_row_tiles = pl.num_programs(1)
    TH, W, Cin = x_main.shape[1], x_main.shape[2], x_main.shape[3]
    THW = TH * W
    Cout = y_ref.shape[-1]
    cdt = slab_ref.dtype  # bf16 MXU operand dtype

    def prep(v):
        # v: (..., W, Cin) activation rows.
        if fuse_bn_relu:
            v = v.astype(jnp.float32)
            v = jnp.maximum(v * scale_ref[...] + shift_ref[...], 0.0)
        return v.astype(cdt)

    # ---- assemble the zero-padded (TH+2, W+2, Cin) input slab in VMEM -------
    # Only the 1-pixel halo is zeroed; the interior is fully overwritten.
    zcol = jnp.zeros((TH + 2, 1, Cin), cdt)
    slab_ref[:, 0:1, :] = zcol                    # left conv padding
    slab_ref[:, W + 1:W + 2, :] = zcol            # right conv padding
    slab_ref[1:TH + 1, 1:W + 1, :] = prep(x_main[...]).reshape(TH, W, Cin)
    slab_ref[0:1, 1:W + 1, :] = prep(x_top[...]).reshape(1, W, Cin)
    slab_ref[TH + 1:TH + 2, 1:W + 1, :] = prep(x_bot[...]).reshape(1, W, Cin)

    zrow = jnp.zeros((1, W, Cin), cdt)

    @pl.when(i == 0)                              # top image border -> zeros
    def _():
        slab_ref[0:1, 1:W + 1, :] = zrow

    @pl.when(i == n_row_tiles - 1)                # bottom image border -> zeros
    def _():
        slab_ref[TH + 1:TH + 2, 1:W + 1, :] = zrow

    # ---- conv = 3 accumulated MXU matmuls (one per kernel row), K = 3*Cin ----
    acc = jnp.zeros((THW, Cout), jnp.float32)
    for dy in range(3):
        for dx in range(3):
            col_ref[:, dx * Cin:(dx + 1) * Cin] = (
                slab_ref[dy:dy + TH, dx:dx + W, :].reshape(THW, Cin))
        acc = acc + jnp.dot(col_ref[...], w_ref[dy],
                            preferred_element_type=jnp.float32)

    # ---- per-tile partial BN stats, accumulated over the row-tile axis ------
    @pl.when(i == 0)
    def _():
        stats_ref[...] = jnp.zeros_like(stats_ref)

    psum = jnp.sum(acc, axis=0, keepdims=True)[None]          # (1, 1, Cout)
    psq = jnp.sum(acc * acc, axis=0, keepdims=True)[None]     # (1, 1, Cout)
    stats_ref[:, 0:1, :] = stats_ref[:, 0:1, :] + psum
    stats_ref[:, 1:2, :] = stats_ref[:, 1:2, :] + psq

    # ---- store the pre-BN conv output tile (lane-dense last dim) ------------
    y_ref[...] = acc.reshape(1, TH, W, Cout).astype(y_ref.dtype)


def _bn_relu_kernel(z_ref, scale_ref, shift_ref, o_ref):
    # Folded BatchNorm + ReLU epilogue: mul + add + max fused with the store.
    z = z_ref[...].astype(jnp.float32)
    o_ref[...] = jnp.maximum(z * scale_ref[...] + shift_ref[...], 0.0)


# ------------------------------ pallas_call wrappers ---------------------------

def _conv_stage(x_act, scale_in, shift_in, w, *, tile_h, fuse_bn_relu, vmem_limit):
    N, H, W, Cin = x_act.shape
    Cout = w.shape[-1]
    TH = tile_h
    nH = H // TH
    THW = TH * W

    kern = functools.partial(_conv_stats_kernel, fuse_bn_relu=fuse_bn_relu)

    in_specs = [
        # main TH-row tile of the activation
        pl.BlockSpec((1, TH, W, Cin), lambda b, i: (b, i, 0, 0)),
        # 1-row halos above / below the tile (clamped at the image border; the
        # kernel overwrites them with conv zero padding there)
        pl.BlockSpec((1, 1, W, Cin),
                     lambda b, i: (b, jnp.maximum(i * TH - 1, 0), 0, 0)),
        pl.BlockSpec((1, 1, W, Cin),
                     lambda b, i: (b, jnp.minimum((i + 1) * TH, H - 1), 0, 0)),
        # folded BN scale/shift for the *input* activation (resident in VMEM)
        pl.BlockSpec((1, Cin), lambda b, i: (0, 0)),
        pl.BlockSpec((1, Cin), lambda b, i: (0, 0)),
        # conv weights (3, 3*Cin, Cout): constant index -> resident across tiles
        pl.BlockSpec((3, 3 * Cin, Cout), lambda b, i: (0, 0, 0)),
    ]
    out_shape = (
        jax.ShapeDtypeStruct((N, H, W, Cout), jnp.bfloat16),   # pre-BN conv out
        jax.ShapeDtypeStruct((N, 2, Cout), jnp.float32),       # per-image stats
    )
    out_specs = (
        pl.BlockSpec((1, TH, W, Cout), lambda b, i: (b, i, 0, 0)),
        pl.BlockSpec((1, 2, Cout), lambda b, i: (b, 0, 0)),    # accumulator
    )
    scratch_shapes = [
        pltpu.VMEM((TH + 2, W + 2, Cin), jnp.bfloat16),        # padded slab
        pltpu.VMEM((THW, 3 * Cin), jnp.bfloat16),              # per-dy im2col
    ]
    y, stats = pl.pallas_call(
        kern,
        grid=(N, nH),
        in_specs=in_specs,
        out_specs=out_specs,
        out_shape=out_shape,
        scratch_shapes=scratch_shapes,
        compiler_params=pltpu.CompilerParams(
            dimension_semantics=("parallel", "arbitrary"),
            vmem_limit_bytes=vmem_limit),
    )(x_act, x_act, x_act, scale_in, shift_in, w)
    return y, stats


def _bn_relu_stage(z, scale, shift, *, tile_h, vmem_limit):
    N, H, W, C = z.shape
    TH = tile_h
    nH = H // TH
    return pl.pallas_call(
        _bn_relu_kernel,
        grid=(N, nH),
        in_specs=[pl.BlockSpec((1, TH, W, C), lambda b, i: (b, i, 0, 0)),
                  pl.BlockSpec((1, C), lambda b, i: (0, 0)),
                  pl.BlockSpec((1, C), lambda b, i: (0, 0))],
        out_specs=pl.BlockSpec((1, TH, W, C), lambda b, i: (b, i, 0, 0)),
        out_shape=jax.ShapeDtypeStruct((N, H, W, C), jnp.float32),
        compiler_params=pltpu.CompilerParams(
            dimension_semantics=("parallel", "parallel"),
            vmem_limit_bytes=vmem_limit),
    )(z, scale, shift)


def _fold_bn_params(stats, gamma, beta, count):
    # stats: (N, 2, C) partial (sum, sum-of-squares) per image.  Fold the
    # training-mode BatchNorm (biased batch variance) into a per-channel affine:
    #   scale = gamma * rsqrt(var + eps),  shift = beta - mean * scale
    s = jnp.sum(stats, axis=0)                     # (2, C)
    mean = s[0] / count
    var = jnp.maximum(s[1] / count - mean * mean, 0.0)
    scale = gamma.reshape(-1) * jax.lax.rsqrt(var + EPS)
    shift = beta.reshape(-1) - mean * scale
    return scale.reshape(1, -1), shift.reshape(1, -1)


def double_conv(x_nchw, params, *, tile_h=None):
    """Forward pass of DoubleConv (training-mode BatchNorm, biased batch stats)."""
    N, Cin, H, W = x_nchw.shape
    w1, w2 = params["w1"], params["w2"]            # HWIO, bias=False
    Cmid, Cout = w1.shape[-1], w2.shape[-1]

    # Only the output/lane dims need 128; tiny Cin is padded just to 8 so the
    # first conv's K = 9*C1p stays small (no 30x wasted MXU work).
    C1p = _round_up(Cin, 8)
    Cmp = _round_up(Cmid, LANE)
    Cop = _round_up(Cout, LANE)

    if tile_h is None:                             # ~<=1024 rows per tile
        target = max(1, 1024 // max(W, 1))
        tile_h = 1
        for d in range(1, H + 1):
            if H % d == 0 and d <= target:
                tile_h = d
    assert H % tile_h == 0, "tile_h must divide H"
    assert (tile_h * W) % 8 == 0, "rows per tile (tile_h*W) must be a multiple of 8"

    vmem_limit = _vmem_limit_bytes()
    count = N * H * W
    f32, bf16 = jnp.float32, jnp.bfloat16

    # ---- wrapper-side layout plumbing: NCHW->NHWC, channel pad, bf16 cast ----
    x = jnp.transpose(x_nchw, (0, 2, 3, 1))
    x = jnp.pad(x, ((0, 0), (0, 0), (0, 0), (0, C1p - Cin))).astype(bf16)

    # Weights flattened per kernel row: (3, 3*Cinp, Coutp), bf16 MXU operands.
    w1p = jnp.pad(w1, ((0, 0), (0, 0), (0, C1p - Cin), (0, Cmp - Cmid)))
    w1p = w1p.reshape(3, 3 * C1p, Cmp).astype(bf16)
    w2p = jnp.pad(w2, ((0, 0), (0, 0), (0, Cmp - Cmid), (0, Cop - Cout)))
    w2p = w2p.reshape(3, 3 * Cmp, Cop).astype(bf16)

    g1p = jnp.pad(params["g1"], (0, Cmp - Cmid)).astype(f32)
    b1p = jnp.pad(params["b1"], (0, Cmp - Cmid)).astype(f32)
    g2p = jnp.pad(params["g2"], (0, Cop - Cout)).astype(f32)
    b2p = jnp.pad(params["b2"], (0, Cop - Cout)).astype(f32)

    ones1 = jnp.ones((1, C1p), f32)                # unused identity affine
    zeros1 = jnp.zeros((1, C1p), f32)

    # ---- stage 1: conv1 tile-by-tile + partial BN1 stats ---------------------
    y1, stats1 = _conv_stage(x, ones1, zeros1, w1p, tile_h=tile_h,
                             fuse_bn_relu=False, vmem_limit=vmem_limit)
    scale1, shift1 = _fold_bn_params(stats1, g1p, b1p, count)

    # ---- stage 2: (BN1+ReLU fused into the load) conv2 + partial BN2 stats ---
    z2, stats2 = _conv_stage(y1, scale1, shift1, w2p, tile_h=tile_h,
                             fuse_bn_relu=True, vmem_limit=vmem_limit)
    scale2, shift2 = _fold_bn_params(stats2, g2p, b2p, count)

    # ---- stage 3: BN2 + ReLU epilogue (lane-dense f32 store) -----------------
    out = _bn_relu_stage(z2, scale2, shift2, tile_h=tile_h, vmem_limit=vmem_limit)

    # Drop channel padding, back to NCHW (layout plumbing only).
    return jnp.transpose(out[..., :Cout], (0, 3, 1, 2))


# ----------------------------- pure-JAX reference ----------------------------

def double_conv_reference(x_nchw, params):
    x = jnp.transpose(x_nchw, (0, 2, 3, 1))

    def block(h, w, g, b):
        y = jax.lax.conv_general_dilated(
            h, w, (1, 1), "SAME",
            dimension_numbers=("NHWC", "HWIO", "NHWC"))
        mu = jnp.mean(y, axis=(0, 1, 2), keepdims=True)
        var = jnp.mean((y - mu) ** 2, axis=(0, 1, 2), keepdims=True)
        y = (y - mu) * jax.lax.rsqrt(var + EPS) * g + b
        return jnp.maximum(y, 0.0)

    h = block(x, params["w1"],
              params["g1"].reshape(1, 1, 1, -1), params["b1"].reshape(1, 1, 1, -1))
    h = block(h, params["w2"],
              params["g2"].reshape(1, 1, 1, -1), params["b2"].reshape(1, 1, 1, -1))
    return jnp.transpose(h, (0, 3, 1, 2))


# ----------------------------------- main -------------------------------------

if __name__ == "__main__":
    key = jax.random.PRNGKey(0)
    k1, k2, k3 = jax.random.split(key, 3)

    # DoubleConv(in_channels=4, out_channels=8)  (mid_channels defaults to out)
    N, Cin, H, W = 2, 4, 16, 16
    Cout = 8
    Cmid = Cout

    x = jax.random.normal(k1, (N, Cin, H, W), jnp.float32)
    params = {
        # Conv weights in HWIO layout (PyTorch OIHW transposed), bias=False.
        "w1": 0.1 * jax.random.normal(k2, (3, 3, Cin, Cmid), jnp.float32),
        "g1": 1.0 + 0.1 * jnp.arange(Cmid, dtype=jnp.float32),
        "b1": 0.01 * jnp.arange(Cmid, dtype=jnp.float32),
        "w2": 0.1 * jax.random.normal(k3, (3, 3, Cmid, Cout), jnp.float32),
        "g2": 1.0 - 0.05 * jnp.arange(Cout, dtype=jnp.float32),
        "b2": -0.02 * jnp.arange(Cout, dtype=jnp.float32),
    }

    # tile_h=8 -> 2 row tiles per image: exercises the halo row loads and the
    # two-phase (partial-stats -> normalize) BatchNorm path.
    out = jax.block_until_ready(double_conv(x, params, tile_h=8))
    ref = jax.block_until_ready(double_conv_reference(x, params))

    assert out.shape == (N, Cout, H, W), out.shape
    # bf16 MXU operands (f32 accumulation / f32 BN stats) -> loosened tolerance
    # vs. the all-f32 reference.
    np.testing.assert_allclose(np.asarray(out), np.asarray(ref),
                               atol=5e-2, rtol=5e-2)
    print("KERNEL_OK")
</pallas_src>

<mosaic_0001>
module attributes {stable_mosaic.version = 11 : i64} {
  func.func @_conv_stats_kernel(%arg0: i32, %arg1: i32, %arg2: memref<1x8x16x8xbf16, #tpu.memory_space<vmem>>, %arg3: memref<1x1x16x8xbf16, #tpu.memory_space<vmem>>, %arg4: memref<1x1x16x8xbf16, #tpu.memory_space<vmem>>, %arg5: memref<1x8xf32, #tpu.memory_space<vmem>>, %arg6: memref<1x8xf32, #tpu.memory_space<vmem>>, %arg7: memref<3x24x128xbf16, #tpu.memory_space<vmem>>, %arg8: memref<1x8x16x128xbf16, #tpu.memory_space<vmem>>, %arg9: memref<1x2x128xf32, #tpu.memory_space<vmem>>, %arg10: memref<10x18x8xbf16, #tpu.memory_space<vmem>>, %arg11: memref<128x24xbf16, #tpu.memory_space<vmem>>) attributes {dimension_semantics = [#tpu.dimension_semantics<parallel>, #tpu.dimension_semantics<arbitrary>], iteration_bounds = array<i64: 2, 2>, scalar_prefetch = 0 : i64, scratch_operands = 2 : i64, tpu.core_type = #tpu.core_type<tc>, window_params = [{transform_indices = @transform_0, window_bounds = array<i64: 1, 8, 16, 8>}, {transform_indices = @transform_1, window_bounds = array<i64: 1, 1, 16, 8>}, {transform_indices = @transform_2, window_bounds = array<i64: 1, 1, 16, 8>}, {pipeline_mode = #tpu.pipeline_mode<synchronous>, transform_indices = @transform_3, window_bounds = array<i64: 1, 8>}, {pipeline_mode = #tpu.pipeline_mode<synchronous>, transform_indices = @transform_4, window_bounds = array<i64: 1, 8>}, {pipeline_mode = #tpu.pipeline_mode<synchronous>, transform_indices = @transform_5, window_bounds = array<i64: 3, 24, 128>}, {transform_indices = @transform_6, window_bounds = array<i64: 1, 8, 16, 128>}, {transform_indices = @transform_7, window_bounds = array<i64: 1, 2, 128>}]} {
    %cst = arith.constant 0.000000e+00 : bf16
    %0 = vector.broadcast %cst : bf16 to vector<10x1x8xbf16>
    %c0 = arith.constant 0 : index
    %c0_0 = arith.constant 0 : index
    %c0_1 = arith.constant 0 : index
    %1 = vector.load %arg10[%c0, %c0_0, %c0_1] : memref<10x18x8xbf16, #tpu.memory_space<vmem>>, vector<10x1x8xbf16>
    tpu.vector_store %arg10[%c0, %c0_0, %c0_1], %0 {strides = array<i32>} : memref<10x18x8xbf16, #tpu.memory_space<vmem>>, vector<10x1x8xbf16>,
    %c0_2 = arith.constant 0 : index
    %c17 = arith.constant 17 : index
    %c0_3 = arith.constant 0 : index
    %2 = vector.load %arg10[%c0_2, %c17, %c0_3] : memref<10x18x8xbf16, #tpu.memory_space<vmem>>, vector<10x1x8xbf16>
    tpu.vector_store %arg10[%c0_2, %c17, %c0_3], %0 {strides = array<i32>} : memref<10x18x8xbf16, #tpu.memory_space<vmem>>, vector<10x1x8xbf16>,
    %c0_4 = arith.constant 0 : index
    %c0_5 = arith.constant 0 : index
    %c0_6 = arith.constant 0 : index
    %c0_7 = arith.constant 0 : index
    %3 = vector.load %arg2[%c0_4, %c0_5, %c0_6, %c0_7] : memref<1x8x16x8xbf16, #tpu.memory_space<vmem>>, vector<1x8x16x8xbf16>
    %4 = vector.shape_cast %3 : vector<1x8x16x8xbf16> to vector<8x16x8xbf16>
    %c1 = arith.constant 1 : index
    %c1_8 = arith.constant 1 : index
    %c0_9 = arith.constant 0 : index
    %5 = vector.load %arg10[%c1, %c1_8, %c0_9] : memref<10x18x8xbf16, #tpu.memory_space<vmem>>, vector<8x16x8xbf16>
    tpu.vector_store %arg10[%c1, %c1_8, %c0_9], %4 {strides = array<i32>} : memref<10x18x8xbf16, #tpu.memory_space<vmem>>, vector<8x16x8xbf16>,
    %c0_10 = arith.constant 0 : index
    %c0_11 = arith.constant 0 : index
    %c0_12 = arith.constant 0 : index
    %c0_13 = arith.constant 0 : index
    %6 = vector.load %arg3[%c0_10, %c0_11, %c0_12, %c0_13] : memref<1x1x16x8xbf16, #tpu.memory_space<vmem>>, vector<1x1x16x8xbf16>
    %7 = vector.shape_cast %6 : vector<1x1x16x8xbf16> to vector<1x16x8xbf16>
    %c0_14 = arith.constant 0 : index
    %c1_15 = arith.constant 1 : index
    %c0_16 = arith.constant 0 : index
    %8 = vector.load %arg10[%c0_14, %c1_15, %c0_16] : memref<10x18x8xbf16, #tpu.memory_space<vmem>>, vector<1x16x8xbf16>
    tpu.vector_store %arg10[%c0_14, %c1_15, %c0_16], %7 {strides = array<i32>} : memref<10x18x8xbf16, #tpu.memory_space<vmem>>, vector<1x16x8xbf16>,
    %c0_17 = arith.constant 0 : index
    %c0_18 = arith.constant 0 : index
    %c0_19 = arith.constant 0 : index
    %c0_20 = arith.constant 0 : index
    %9 = vector.load %arg4[%c0_17, %c0_18, %c0_19, %c0_20] : memref<1x1x16x8xbf16, #tpu.memory_space<vmem>>, vector<1x1x16x8xbf16>
    %10 = vector.shape_cast %9 : vector<1x1x16x8xbf16> to vector<1x16x8xbf16>
    %c9 = arith.constant 9 : index
    %c1_21 = arith.constant 1 : index
    %c0_22 = arith.constant 0 : index
    %11 = vector.load %arg10[%c9, %c1_21, %c0_22] : memref<10x18x8xbf16, #tpu.memory_space<vmem>>, vector<1x16x8xbf16>
    tpu.vector_store %arg10[%c9, %c1_21, %c0_22], %10 {strides = array<i32>} : memref<10x18x8xbf16, #tpu.memory_space<vmem>>, vector<1x16x8xbf16>,
    %cst_23 = arith.constant 0.000000e+00 : bf16
    %12 = vector.broadcast %cst_23 : bf16 to vector<1x16x8xbf16>
    %c0_i32 = arith.constant 0 : i32
    %13 = arith.cmpi eq, %arg1, %c0_i32 : i32
    %14 = arith.extui %13 : i1 to i32
    %c0_i32_24 = arith.constant 0 : i32
    %15 = arith.cmpi ne, %14, %c0_i32_24 : i32
    scf.if %15 {
      %c0_107 = arith.constant 0 : index
      %c1_108 = arith.constant 1 : index
      %c0_109 = arith.constant 0 : index
      %81 = vector.load %arg10[%c0_107, %c1_108, %c0_109] : memref<10x18x8xbf16, #tpu.memory_space<vmem>>, vector<1x16x8xbf16>
      tpu.vector_store %arg10[%c0_107, %c1_108, %c0_109], %12 {strides = array<i32>} : memref<10x18x8xbf16, #tpu.memory_space<vmem>>, vector<1x16x8xbf16>,
    } else {
    }
    %c1_i32 = arith.constant 1 : i32
    %16 = arith.cmpi eq, %arg1, %c1_i32 : i32
    %17 = arith.extui %16 : i1 to i32
    %c0_i32_25 = arith.constant 0 : i32
    %18 = arith.cmpi ne, %17, %c0_i32_25 : i32
    scf.if %18 {
      %c9_107 = arith.constant 9 : index
      %c1_108 = arith.constant 1 : index
      %c0_109 = arith.constant 0 : index
      %81 = vector.load %arg10[%c9_107, %c1_108, %c0_109] : memref<10x18x8xbf16, #tpu.memory_space<vmem>>, vector<1x16x8xbf16>
      tpu.vector_store %arg10[%c9_107, %c1_108, %c0_109], %12 {strides = array<i32>} : memref<10x18x8xbf16, #tpu.memory_space<vmem>>, vector<1x16x8xbf16>,
    } else {
    }
    %cst_26 = arith.constant 0.000000e+00 : f32
    %19 = vector.broadcast %cst_26 : f32 to vector<128x128xf32>
    %c0_27 = arith.constant 0 : index
    %c0_28 = arith.constant 0 : index
    %c0_29 = arith.constant 0 : index
    %20 = vector.load %arg10[%c0_27, %c0_28, %c0_29] : memref<10x18x8xbf16, #tpu.memory_space<vmem>>, vector<8x16x8xbf16>
    %21 = vector.shape_cast %20 : vector<8x16x8xbf16> to vector<128x8xbf16>
    %c0_30 = arith.constant 0 : index
    %c0_31 = arith.constant 0 : index
    %22 = vector.load %arg11[%c0_30, %c0_31] : memref<128x24xbf16, #tpu.memory_space<vmem>>, vector<128x8xbf16>
    tpu.vector_store %arg11[%c0_30, %c0_31], %21 {strides = array<i32>} : memref<128x24xbf16, #tpu.memory_space<vmem>>, vector<128x8xbf16>,
    %c0_32 = arith.constant 0 : index
    %c1_33 = arith.constant 1 : index
    %c0_34 = arith.constant 0 : index
    %23 = vector.load %arg10[%c0_32, %c1_33, %c0_34] : memref<10x18x8xbf16, #tpu.memory_space<vmem>>, vector<8x16x8xbf16>
    %24 = vector.shape_cast %23 : vector<8x16x8xbf16> to vector<128x8xbf16>
    %c0_35 = arith.constant 0 : index
    %c8 = arith.constant 8 : index
    %25 = vector.load %arg11[%c0_35, %c8] : memref<128x24xbf16, #tpu.memory_space<vmem>>, vector<128x8xbf16>
    tpu.vector_store %arg11[%c0_35, %c8], %24 {strides = array<i32>} : memref<128x24xbf16, #tpu.memory_space<vmem>>, vector<128x8xbf16>,
    %c0_36 = arith.constant 0 : index
    %c2 = arith.constant 2 : index
    %c0_37 = arith.constant 0 : index
    %26 = vector.load %arg10[%c0_36, %c2, %c0_37] : memref<10x18x8xbf16, #tpu.memory_space<vmem>>, vector<8x16x8xbf16>
    %27 = vector.shape_cast %26 : vector<8x16x8xbf16> to vector<128x8xbf16>
    %c0_38 = arith.constant 0 : index
    %c16 = arith.constant 16 : index
    %28 = vector.load %arg11[%c0_38, %c16] : memref<128x24xbf16, #tpu.memory_space<vmem>>, vector<128x8xbf16>
    tpu.vector_store %arg11[%c0_38, %c16], %27 {strides = array<i32>} : memref<128x24xbf16, #tpu.memory_space<vmem>>, vector<128x8xbf16>,
    %c0_39 = arith.constant 0 : index
    %c0_40 = arith.constant 0 : index
    %29 = vector.load %arg11[%c0_39, %c0_40] : memref<128x24xbf16, #tpu.memory_space<vmem>>, vector<128x24xbf16>
    %c0_41 = arith.constant 0 : index
    %c0_42 = arith.constant 0 : index
    %c0_43 = arith.constant 0 : index
    %30 = vector.load %arg7[%c0_41, %c0_42, %c0_43] : memref<3x24x128xbf16, #tpu.memory_space<vmem>>, vector<1x24x128xbf16>
    %31 = vector.shape_cast %30 : vector<1x24x128xbf16> to vector<24x128xbf16>
    %cst_44 = arith.constant dense<0.000000e+00> : vector<128x128xf32>
    %32 = tpu.matmul %29, %31, %cst_44 {dimension_numbers = #tpu.dot_dimension_numbers<[1], [0], [0], [1], [0, 0, 1, 1], [], []>} : vector<128x24xbf16>, vector<24x128xbf16>, vector<128x128xf32> -> vector<128x128xf32>
    %33 = arith.addf %19, %32 : vector<128x128xf32>
    %c1_45 = arith.constant 1 : index
    %c0_46 = arith.constant 0 : index
    %c0_47 = arith.constant 0 : index
    %34 = vector.load %arg10[%c1_45, %c0_46, %c0_47] : memref<10x18x8xbf16, #tpu.memory_space<vmem>>, vector<8x16x8xbf16>
    %35 = vector.shape_cast %34 : vector<8x16x8xbf16> to vector<128x8xbf16>
    %c0_48 = arith.constant 0 : index
    %c0_49 = arith.constant 0 : index
    %36 = vector.load %arg11[%c0_48, %c0_49] : memref<128x24xbf16, #tpu.memory_space<vmem>>, vector<128x8xbf16>
    tpu.vector_store %arg11[%c0_48, %c0_49], %35 {strides = array<i32>} : memref<128x24xbf16, #tpu.memory_space<vmem>>, vector<128x8xbf16>,
    %c1_50 = arith.constant 1 : index
    %c1_51 = arith.constant 1 : index
    %c0_52 = arith.constant 0 : index
    %37 = vector.load %arg10[%c1_50, %c1_51, %c0_52] : memref<10x18x8xbf16, #tpu.memory_space<vmem>>, vector<8x16x8xbf16>
    %38 = vector.shape_cast %37 : vector<8x16x8xbf16> to vector<128x8xbf16>
    %c0_53 = arith.constant 0 : index
    %c8_54 = arith.constant 8 : index
    %39 = vector.load %arg11[%c0_53, %c8_54] : memref<128x24xbf16, #tpu.memory_space<vmem>>, vector<128x8xbf16>
    tpu.vector_store %arg11[%c0_53, %c8_54], %38 {strides = array<i32>} : memref<128x24xbf16, #tpu.memory_space<vmem>>, vector<128x8xbf16>,
    %c1_55 = arith.constant 1 : index
    %c2_56 = arith.constant 2 : index
    %c0_57 = arith.constant 0 : index
    %40 = vector.load %arg10[%c1_55, %c2_56, %c0_57] : memref<10x18x8xbf16, #tpu.memory_space<vmem>>, vector<8x16x8xbf16>
    %41 = vector.shape_cast %40 : vector<8x16x8xbf16> to vector<128x8xbf16>
    %c0_58 = arith.constant 0 : index
    %c16_59 = arith.constant 16 : index
    %42 = vector.load %arg11[%c0_58, %c16_59] : memref<128x24xbf16, #tpu.memory_space<vmem>>, vector<128x8xbf16>
    tpu.vector_store %arg11[%c0_58, %c16_59], %41 {strides = array<i32>} : memref<128x24xbf16, #tpu.memory_space<vmem>>, vector<128x8xbf16>,
    %c0_60 = arith.constant 0 : index
    %c0_61 = arith.constant 0 : index
    %43 = vector.load %arg11[%c0_60, %c0_61] : memref<128x24xbf16, #tpu.memory_space<vmem>>, vector<128x24xbf16>
    %c1_62 = arith.constant 1 : index
    %c0_63 = arith.constant 0 : index
    %c0_64 = arith.constant 0 : index
    %44 = vector.load %arg7[%c1_62, %c0_63, %c0_64] : memref<3x24x128xbf16, #tpu.memory_space<vmem>>, vector<1x24x128xbf16>
    %45 = vector.shape_cast %44 : vector<1x24x128xbf16> to vector<24x128xbf16>
    %cst_65 = arith.constant dense<0.000000e+00> : vector<128x128xf32>
    %46 = tpu.matmul %43, %45, %cst_65 {dimension_numbers = #tpu.dot_dimension_numbers<[1], [0], [0], [1], [0, 0, 1, 1], [], []>} : vector<128x24xbf16>, vector<24x128xbf16>, vector<128x128xf32> -> vector<128x128xf32>
    %47 = arith.addf %33, %46 : vector<128x128xf32>
    %c2_66 = arith.constant 2 : index
    %c0_67 = arith.constant 0 : index
    %c0_68 = arith.constant 0 : index
    %48 = vector.load %arg10[%c2_66, %c0_67, %c0_68] : memref<10x18x8xbf16, #tpu.memory_space<vmem>>, vector<8x16x8xbf16>
    %49 = vector.shape_cast %48 : vector<8x16x8xbf16> to vector<128x8xbf16>
    %c0_69 = arith.constant 0 : index
    %c0_70 = arith.constant 0 : index
    %50 = vector.load %arg11[%c0_69, %c0_70] : memref<128x24xbf16, #tpu.memory_space<vmem>>, vector<128x8xbf16>
    tpu.vector_store %arg11[%c0_69, %c0_70], %49 {strides = array<i32>} : memref<128x24xbf16, #tpu.memory_space<vmem>>, vector<128x8xbf16>,
    %c2_71 = arith.constant 2 : index
    %c1_72 = arith.constant 1 : index
    %c0_73 = arith.constant 0 : index
    %51 = vector.load %arg10[%c2_71, %c1_72, %c0_73] : memref<10x18x8xbf16, #tpu.memory_space<vmem>>, vector<8x16x8xbf16>
    %52 = vector.shape_cast %51 : vector<8x16x8xbf16> to vector<128x8xbf16>
    %c0_74 = arith.constant 0 : index
    %c8_75 = arith.constant 8 : index
    %53 = vector.load %arg11[%c0_74, %c8_75] : memref<128x24xbf16, #tpu.memory_space<vmem>>, vector<128x8xbf16>
    tpu.vector_store %arg11[%c0_74, %c8_75], %52 {strides = array<i32>} : memref<128x24xbf16, #tpu.memory_space<vmem>>, vector<128x8xbf16>,
    %c2_76 = arith.constant 2 : index
    %c2_77 = arith.constant 2 : index
    %c0_78 = arith.constant 0 : index
    %54 = vector.load %arg10[%c2_76, %c2_77, %c0_78] : memref<10x18x8xbf16, #tpu.memory_space<vmem>>, vector<8x16x8xbf16>
    %55 = vector.shape_cast %54 : vector<8x16x8xbf16> to vector<128x8xbf16>
    %c0_79 = arith.constant 0 : index
    %c16_80 = arith.constant 16 : index
    %56 = vector.load %arg11[%c0_79, %c16_80] : memref<128x24xbf16, #tpu.memory_space<vmem>>, vector<128x8xbf16>
    tpu.vector_store %arg11[%c0_79, %c16_80], %55 {strides = array<i32>} : memref<128x24xbf16, #tpu.memory_space<vmem>>, vector<128x8xbf16>,
    %c0_81 = arith.constant 0 : index
    %c0_82 = arith.constant 0 : index
    %57 = vector.load %arg11[%c0_81, %c0_82] : memref<128x24xbf16, #tpu.memory_space<vmem>>, vector<128x24xbf16>
    %c2_83 = arith.constant 2 : index
    %c0_84 = arith.constant 0 : index
    %c0_85 = arith.constant 0 : index
    %58 = vector.load %arg7[%c2_83, %c0_84, %c0_85] : memref<3x24x128xbf16, #tpu.memory_space<vmem>>, vector<1x24x128xbf16>
    %59 = vector.shape_cast %58 : vector<1x24x128xbf16> to vector<24x128xbf16>
    %cst_86 = arith.constant dense<0.000000e+00> : vector<128x128xf32>
    %60 = tpu.matmul %57, %59, %cst_86 {dimension_numbers = #tpu.dot_dimension_numbers<[1], [0], [0], [1], [0, 0, 1, 1], [], []>} : vector<128x24xbf16>, vector<24x128xbf16>, vector<128x128xf32> -> vector<128x128xf32>
    %61 = arith.addf %47, %60 : vector<128x128xf32>
    %c0_i32_87 = arith.constant 0 : i32
    %62 = arith.cmpi eq, %arg1, %c0_i32_87 : i32
    %63 = arith.extui %62 : i1 to i32
    %c0_i32_88 = arith.constant 0 : i32
    %64 = arith.cmpi ne, %63, %c0_i32_88 : i32
    scf.if %64 {
      %cst_107 = arith.constant 0.000000e+00 : f32
      %81 = vector.broadcast %cst_107 : f32 to vector<1x2x128xf32>
      %c0_108 = arith.constant 0 : index
      %c0_109 = arith.constant 0 : index
      %c0_110 = arith.constant 0 : index
      %82 = vector.load %arg9[%c0_108, %c0_109, %c0_110] : memref<1x2x128xf32, #tpu.memory_space<vmem>>, vector<1x2x128xf32>
      tpu.vector_store %arg9[%c0_108, %c0_109, %c0_110], %81 {strides = array<i32>} : memref<1x2x128xf32, #tpu.memory_space<vmem>>, vector<1x2x128xf32>,
    } else {
    }
    %cst_89 = arith.constant dense<0.000000e+00> : vector<128xf32>
    %65 = vector.multi_reduction <add>, %61, %cst_89 [0] : vector<128x128xf32> to vector<128xf32>
    %66 = vector.shape_cast %65 : vector<128xf32> to vector<1x128xf32>
    %67 = vector.shape_cast %66 : vector<1x128xf32> to vector<1x1x128xf32>
    %68 = arith.mulf %61, %61 : vector<128x128xf32>
    %cst_90 = arith.constant dense<0.000000e+00> : vector<128xf32>
    %69 = vector.multi_reduction <add>, %68, %cst_90 [0] : vector<128x128xf32> to vector<128xf32>
    %70 = vector.shape_cast %69 : vector<128xf32> to vector<1x128xf32>
    %71 = vector.shape_cast %70 : vector<1x128xf32> to vector<1x1x128xf32>
    %c0_91 = arith.constant 0 : index
    %c0_92 = arith.constant 0 : index
    %c0_93 = arith.constant 0 : index
    %72 = vector.load %arg9[%c0_91, %c0_92, %c0_93] : memref<1x2x128xf32, #tpu.memory_space<vmem>>, vector<1x1x128xf32>
    %73 = arith.addf %72, %67 : vector<1x1x128xf32>
    %c0_94 = arith.constant 0 : index
    %c0_95 = arith.constant 0 : index
    %c0_96 = arith.constant 0 : index
    %74 = vector.load %arg9[%c0_94, %c0_95, %c0_96] : memref<1x2x128xf32, #tpu.memory_space<vmem>>, vector<1x1x128xf32>
    tpu.vector_store %arg9[%c0_94, %c0_95, %c0_96], %73 {strides = array<i32>} : memref<1x2x128xf32, #tpu.memory_space<vmem>>, vector<1x1x128xf32>,
    %c0_97 = arith.constant 0 : index
    %c1_98 = arith.constant 1 : index
    %c0_99 = arith.constant 0 : index
    %75 = vector.load %arg9[%c0_97, %c1_98, %c0_99] : memref<1x2x128xf32, #tpu.memory_space<vmem>>, vector<1x1x128xf32>
    %76 = arith.addf %75, %71 : vector<1x1x128xf32>
    %c0_100 = arith.constant 0 : index
    %c1_101 = arith.constant 1 : index
    %c0_102 = arith.constant 0 : index
    %77 = vector.load %arg9[%c0_100, %c1_101, %c0_102] : memref<1x2x128xf32, #tpu.memory_space<vmem>>, vector<1x1x128xf32>
    tpu.vector_store %arg9[%c0_100, %c1_101, %c0_102], %76 {strides = array<i32>} : memref<1x2x128xf32, #tpu.memory_space<vmem>>, vector<1x1x128xf32>,
    %78 = vector.shape_cast %61 : vector<128x128xf32> to vector<1x8x16x128xf32>
    %79 = arith.truncf %78 : vector<1x8x16x128xf32> to vector<1x8x16x128xbf16>
    %c0_103 = arith.constant 0 : index
    %c0_104 = arith.constant 0 : index
    %c0_105 = arith.constant 0 : index
    %c0_106 = arith.constant 0 : index
    %80 = vector.load %arg8[%c0_103, %c0_104, %c0_105, %c0_106] : memref<1x8x16x128xbf16, #tpu.memory_space<vmem>>, vector<1x8x16x128xbf16>
    tpu.vector_store %arg8[%c0_103, %c0_104, %c0_105, %c0_106], %79 {strides = array<i32>} : memref<1x8x16x128xbf16, #tpu.memory_space<vmem>>, vector<1x8x16x128xbf16>,
    return
  }
  func.func @transform_0(%arg0: i32, %arg1: i32) -> (i32, i32, i32, i32) {
    %c0_i32 = arith.constant 0 : i32
    %c0_i32_0 = arith.constant 0 : i32
    %c0_i32_1 = arith.constant 0 : i32
    return %arg0, %arg1, %c0_i32, %c0_i32_0 : i32, i32, i32, i32
  }
  func.func @transform_1(%arg0: i32, %arg1: i32) -> (i32, i32, i32, i32) {
    %c8_i32 = arith.constant 8 : i32
    %0 = arith.muli %arg1, %c8_i32 : i32
    %c1_i32 = arith.constant 1 : i32
    %1 = arith.subi %0, %c1_i32 : i32
    %c0_i32 = arith.constant 0 : i32
    %2 = arith.maxsi %1, %c0_i32 : i32
    %c0_i32_0 = arith.constant 0 : i32
    %c0_i32_1 = arith.constant 0 : i32
    %c0_i32_2 = arith.constant 0 : i32
    return %arg0, %2, %c0_i32_0, %c0_i32_1 : i32, i32, i32, i32
  }
  func.func @transform_2(%arg0: i32, %arg1: i32) -> (i32, i32, i32, i32) {
    %c1_i32 = arith.constant 1 : i32
    %0 = arith.addi %arg1, %c1_i32 : i32
    %c8_i32 = arith.constant 8 : i32
    %1 = arith.muli %0, %c8_i32 : i32
    %c15_i32 = arith.constant 15 : i32
    %2 = arith.minsi %1, %c15_i32 : i32
    %c0_i32 = arith.constant 0 : i32
    %c0_i32_0 = arith.constant 0 : i32
    %c0_i32_1 = arith.constant 0 : i32
    return %arg0, %2, %c0_i32, %c0_i32_0 : i32, i32, i32, i32
  }
  func.func @transform_3(%arg0: i32, %arg1: i32) -> (i32, i32) {
    %c0_i32 = arith.constant 0 : i32
    %c0_i32_0 = arith.constant 0 : i32
    %c0_i32_1 = arith.constant 0 : i32
    return %c0_i32, %c0_i32_0 : i32, i32
  }
  func.func @transform_4(%arg0: i32, %arg1: i32) -> (i32, i32) {
    %c0_i32 = arith.constant 0 : i32
    %c0_i32_0 = arith.constant 0 : i32
    %c0_i32_1 = arith.constant 0 : i32
    return %c0_i32, %c0_i32_0 : i32, i32
  }
  func.func @transform_5(%arg0: i32, %arg1: i32) -> (i32, i32, i32) {
    %c0_i32 = arith.constant 0 : i32
    %c0_i32_0 = arith.constant 0 : i32
    %c0_i32_1 = arith.constant 0 : i32
    %c0_i32_2 = arith.constant 0 : i32
    return %c0_i32, %c0_i32_0, %c0_i32_1 : i32, i32, i32
  }
  func.func @transform_6(%arg0: i32, %arg1: i32) -> (i32, i32, i32, i32) {
    %c0_i32 = arith.constant 0 : i32
    %c0_i32_0 = arith.constant 0 : i32
    %c0_i32_1 = arith.constant 0 : i32
    return %arg0, %arg1, %c0_i32, %c0_i32_0 : i32, i32, i32, i32
  }
  func.func @transform_7(%arg0: i32, %arg1: i32) -> (i32, i32, i32) {
    %c0_i32 = arith.constant 0 : i32
    %c0_i32_0 = arith.constant 0 : i32
    %c0_i32_1 = arith.constant 0 : i32
    return %arg0, %c0_i32, %c0_i32_0 : i32, i32, i32
  }
}

</mosaic_0001>

<llo_original>
// kernel: tpu_custom_call.1
$region0: #{tpu_custom_call.1}
  #allocation0 [shape = 'u32[]', space=smem, size = 0x4, offset = 0x4, fixed_abs, tag = 'smem constant byte address 0x4 - core index']
  #allocation1 [shape = 'u32[144,128]{1,0:T(1,128)}', space=vmem, size = 0x12000, scoped, tag = 'internal scratch']
  #allocation2 [shape = 'bf16[10,18,8]{2,1,0:T(8,128)(2,1)}', space=vmem, size = 0xf000, scoped, tag = 'scratch operand']
  #allocation3 [shape = 'bf16[128,24]{1,0:T(16,128)(2,1)}', space=vmem, size = 0x8000, scoped, tag = 'scratch operand']
  %s0 = inlined_call_operand.vmem [shape: bf16[2,16,16,8], index: 0, kind: input, shape index: {}]
  %s1 = inlined_call_operand.vmem [shape: bf16[2,16,16,8], index: 1, kind: input, shape index: {}]
  %s2 = inlined_call_operand.vmem [shape: bf16[2,16,16,8], index: 2, kind: input, shape index: {}]
  %s3 = inlined_call_operand.vmem [shape: f32[1,8], index: 3, kind: input, shape index: {}]
  %s4 = inlined_call_operand.vmem [shape: f32[1,8], index: 4, kind: input, shape index: {}]
  %s5 = inlined_call_operand.vmem [shape: bf16[3,24,128], index: 5, kind: input, shape index: {}]
  %s6 = inlined_call_operand.hbm [shape: bf16[2,16,16,128], index: 6, kind: output, shape index: {0}]
  %s7 = inlined_call_operand.hbm [shape: f32[2,2,128], index: 7, kind: output, shape index: {1}]
  %8 = xla_tuple %s6, %s7
  %s9 = sld [smem:[#allocation0]]
  $region77: #{tpu_custom_call.1} parent=0
    _
  %s11 = ssub.s32 1, %s9
  %s12 = scalar_select 0, %s11, %s9
  $region1: #{tpu_custom_call.1} parent=0
    #allocation4 [shape = 'u8[65536]{0}', space=vmem, size = 0x10000, scoped, tag = 'output window, operand 0']
    #allocation5 [shape = 's32[2]{0}', space=sflag, size = 0x8, scoped, tag = 'scoped memory for tpu_custom_call.1']
    #allocation6 [shape = 'u8[2048]{0}', space=vmem, size = 0x800, scoped, tag = 'output window, operand 1']
    #allocation7 [shape = 's32[2]{0}', space=sflag, size = 0x8, scoped, tag = 'scoped memory for tpu_custom_call.1']
    %13 = vsyncpa [#allocation5], 0
    %s14 = scalar_lea.sflag [#allocation5], 1
    %15 = vsyncpa %s14, 0
    %16 = vsyncpa [#allocation7], 0
    %s17 = scalar_lea.sflag [#allocation7], 1
    %18 = vsyncpa %s17, 0
    loop: start=0, step=1, limit=6
    $region2: #{tpu_custom_call.1} parent=1 // loop_pre_header
      _
    $region3: #{tpu_custom_call.1} parent=1 // loop_header
      %s20 = sphi 0, %s24
      %p21 = scmp.ge.s32.totalorder %s20, 6
      %s27 = sphi 0, %s39
      %s28 = sphi 0, %s35
      %s29 = sphi 0, %s27
      %s30 = sphi 0, %s28
      %s31 = sphi 0, %s29
      %s32 = sphi 0, %s30
      %s44 = sphi 0, %s46
      %s47 = sphi 0, %s44
      %s48 = sphi 0, %s47
      %s64 = sphi 0, %s48
      %s80 = sphi 0, %s82
      %s83 = sphi 0, %s80
      %s84 = sphi 0, %s83
      %s100 = sphi 0, %s84
      %s116 = sphi 0, %s118
      %s119 = sphi 0, %s116
      %s120 = sphi 0, %s119
      %s136 = sphi 0, %s120
      %s140 = sphi 0, %s140
      %s142 = sphi 0, %s140
      %s143 = sphi 0, %s142
      %s157 = sphi 0, %s143
      %s161 = sphi 0, %s161
      %s163 = sphi 0, %s161
      %s164 = sphi 0, %s163
      %s178 = sphi 0, %s164
      %s182 = sphi 0, %s182
      %s184 = sphi 0, %s182
      %s185 = sphi 0, %s184
      %s199 = sphi 0, %s185
      %s207 = sphi 0, %s209
      %s210 = sphi 0, %s207
      %s211 = sphi 0, %s210
      %s227 = sphi 0, %s211
      %s233 = sphi 0, %s235
      %s236 = sphi 0, %s233
      %s237 = sphi 0, %s236
      %s253 = sphi 0, %s237
    $region4: #{tpu_custom_call.1} parent=1 // loop_header_branch
      %23 = sbr.rel (%p21) target = $region8
    $region5: #{tpu_custom_call.1} parent=1 // loop_body
      %s25 = ssub.s32 %s20, 1
      %s26 = ssub.s32 %s20, 2
      %s33 = sadd.s32 1, %s28
      %p34 = scmp.ge.s32.totalorder %s33, 2
      %s35 = scalar_select %p34, 0, %s33
      %s36 = sadd.s32 1, %s27
      %s37 = scalar_select %p34, %s36, %s27
      %p38 = scmp.ge.s32.totalorder %s37, 2
      %s39 = scalar_select %p38, 0, %s37
      %s40 = ssub.s32 %s27, %s39
      %s41 = ssub.s32 %s28, %s35
      %s42 = sor.u32 %s40, %s41
      %p43 = scmp.eq.s32.totalorder %s42, 0
      %s45 = sadd.s32 %s44, 1
      %s46 = scalar_select %p43, %s44, %s45
      %p49 = pneg %p43
      %p50 = scmp.eq.s32.totalorder %s20, 3
      %p51 = por %p49, %p50
      %p52 = scmp.ne.s32.totalorder %s44, %s47
      %p53 = scmp.eq.s32.totalorder %s20, 0
      %p54 = por %p52, %p53
      %p55 = scmp.ne.s32.totalorder %s44, %s47
      %p56 = scmp.eq.s32.totalorder %s25, 3
      %p57 = por %p55, %p56
      %p58 = scmp.ne.s32.totalorder %s47, %s48
      %p59 = scmp.eq.s32.totalorder %s25, 0
      %p60 = por %p58, %p59
      %p61 = scmp.ne.s32.totalorder %s47, %s48
      %p62 = scmp.eq.s32.totalorder %s26, 3
      %p63 = por %p61, %p62
      %p65 = scmp.ne.s32.totalorder %s48, %s64
      %p66 = scmp.eq.s32.totalorder %s26, 0
      %p67 = por %p65, %p66
      %s68 = smul.u32 %s28, 8
      %s69 = ssub.s32 %s68, 1
      %p70 = scmp.gt.s32.totalorder %s69, 0
      %s71 = scalar_select %p70, %s69, 0
      %s72 = smul.u32 %s35, 8
      %s73 = ssub.s32 %s72, 1
      %p74 = scmp.gt.s32.totalorder %s73, 0
      %s75 = scalar_select %p74, %s73, 0
      %s76 = ssub.s32 %s27, %s39
      %s77 = ssub.s32 %s71, %s75
      %s78 = sor.u32 %s76, %s77
      %p79 = scmp.eq.s32.totalorder %s78, 0
      %s81 = sadd.s32 %s80, 1
      %s82 = scalar_select %p79, %s80, %s81
      %p85 = pneg %p79
      %p86 = scmp.eq.s32.totalorder %s20, 3
      %p87 = por %p85, %p86
      %p88 = scmp.ne.s32.totalorder %s80, %s83
      %p89 = scmp.eq.s32.totalorder %s20, 0
      %p90 = por %p88, %p89
      %p91 = scmp.ne.s32.totalorder %s80, %s83
      %p92 = scmp.eq.s32.totalorder %s25, 3
      %p93 = por %p91, %p92
      %p94 = scmp.ne.s32.totalorder %s83, %s84
      %p95 = scmp.eq.s32.totalorder %s25, 0
      %p96 = por %p94, %p95
      %p97 = scmp.ne.s32.totalorder %s83, %s84
      %p98 = scmp.eq.s32.totalorder %s26, 3
      %p99 = por %p97, %p98
      %p101 = scmp.ne.s32.totalorder %s84, %s100
      %p102 = scmp.eq.s32.totalorder %s26, 0
      %p103 = por %p101, %p102
      %s104 = sadd.s32 %s28, 1
      %s105 = smul.u32 %s104, 8
      %p106 = scmp.lt.s32.totalorder %s105, 15
      %s107 = scalar_select %p106, %s105, 15
      %s108 = sadd.s32 %s35, 1
      %s109 = smul.u32 %s108, 8
      %p110 = scmp.lt.s32.totalorder %s109, 15
      %s111 = scalar_select %p110, %s109, 15
      %s112 = ssub.s32 %s27, %s39
      %s113 = ssub.s32 %s107, %s111
      %s114 = sor.u32 %s112, %s113
      %p115 = scmp.eq.s32.totalorder %s114, 0
      %s117 = sadd.s32 %s116, 1
      %s118 = scalar_select %p115, %s116, %s117
      %p121 = pneg %p115
      %p122 = scmp.eq.s32.totalorder %s20, 3
      %p123 = por %p121, %p122
      %p124 = scmp.ne.s32.totalorder %s116, %s119
      %p125 = scmp.eq.s32.totalorder %s20, 0
      %p126 = por %p124, %p125
      %p127 = scmp.ne.s32.totalorder %s116, %s119
      %p128 = scmp.eq.s32.totalorder %s25, 3
      %p129 = por %p127, %p128
      %p130 = scmp.ne.s32.totalorder %s119, %s120
      %p131 = scmp.eq.s32.totalorder %s25, 0
      %p132 = por %p130, %p131
      %p133 = scmp.ne.s32.totalorder %s119, %s120
      %p134 = scmp.eq.s32.totalorder %s26, 3
      %p135 = por %p133, %p134
      %p137 = scmp.ne.s32.totalorder %s120, %s136
      %p138 = scmp.eq.s32.totalorder %s26, 0
      %p139 = por %p137, %p138
      %s141 = sadd.s32 %s140, 1
      %p144 = scmp.eq.s32.totalorder %s20, 3
      %p145 = scmp.ne.s32.totalorder %s140, %s142
      %p146 = scmp.eq.s32.totalorder %s20, 0
      %p147 = por %p145, %p146
      %p148 = scmp.ne.s32.totalorder %s140, %s142
      %p149 = scmp.eq.s32.totalorder %s25, 3
      %p150 = por %p148, %p149
      %p151 = scmp.ne.s32.totalorder %s142, %s143
      %p152 = scmp.eq.s32.totalorder %s25, 0
      %p153 = por %p151, %p152
      %p154 = scmp.ne.s32.totalorder %s142, %s143
      %p155 = scmp.eq.s32.totalorder %s26, 3
      %p156 = por %p154, %p155
      %p158 = scmp.ne.s32.totalorder %s143, %s157
      %p159 = scmp.eq.s32.totalorder %s26, 0
      %p160 = por %p158, %p159
      %s162 = sadd.s32 %s161, 1
      %p165 = scmp.eq.s32.totalorder %s20, 3
      %p166 = scmp.ne.s32.totalorder %s161, %s163
      %p167 = scmp.eq.s32.totalorder %s20, 0
      %p168 = por %p166, %p167
      %p169 = scmp.ne.s32.totalorder %s161, %s163
      %p170 = scmp.eq.s32.totalorder %s25, 3
      %p171 = por %p169, %p170
      %p172 = scmp.ne.s32.totalorder %s163, %s164
      %p173 = scmp.eq.s32.totalorder %s25, 0
      %p174 = por %p172, %p173
      %p175 = scmp.ne.s32.totalorder %s163, %s164
      %p176 = scmp.eq.s32.totalorder %s26, 3
      %p177 = por %p175, %p176
      %p179 = scmp.ne.s32.totalorder %s164, %s178
      %p180 = scmp.eq.s32.totalorder %s26, 0
      %p181 = por %p179, %p180
      %s183 = sadd.s32 %s182, 1
      %p186 = scmp.eq.s32.totalorder %s20, 3
      %p187 = scmp.ne.s32.totalorder %s182, %s184
      %p188 = scmp.eq.s32.totalorder %s20, 0
      %p189 = por %p187, %p188
      %p190 = scmp.ne.s32.totalorder %s182, %s184
      %p191 = scmp.eq.s32.totalorder %s25, 3
      %p192 = por %p190, %p191
      %p193 = scmp.ne.s32.totalorder %s184, %s185
      %p194 = scmp.eq.s32.totalorder %s25, 0
      %p195 = por %p193, %p194
      %p196 = scmp.ne.s32.totalorder %s184, %s185
      %p197 = scmp.eq.s32.totalorder %s26, 3
      %p198 = por %p196, %p197
      %p200 = scmp.ne.s32.totalorder %s185, %s199
      %p201 = scmp.eq.s32.totalorder %s26, 0
      %p202 = por %p200, %p201
      %s203 = ssub.s32 %s27, %s39
      %s204 = ssub.s32 %s28, %s35
      %s205 = sor.u32 %s203, %s204
      %p206 = scmp.eq.s32.totalorder %s205, 0
      %s208 = sadd.s32 %s207, 1
      %s209 = scalar_select %p206, %s207, %s208
      %p212 = pneg %p206
      %p213 = scmp.eq.s32.totalorder %s20, 3
      %p214 = por %p212, %p213
      %p215 = scmp.ne.s32.totalorder %s207, %s210
      %p216 = scmp.eq.s32.totalorder %s20, 0
      %p217 = por %p215, %p216
      %p218 = scmp.ne.s32.totalorder %s207, %s210
      %p219 = scmp.eq.s32.totalorder %s25, 3
      %p220 = por %p218, %p219
      %p221 = scmp.ne.s32.totalorder %s210, %s211
      %p222 = scmp.eq.s32.totalorder %s25, 0
      %p223 = por %p221, %p222
      %p224 = scmp.ne.s32.totalorder %s210, %s211
      %p225 = scmp.eq.s32.totalorder %s26, 3
      %p226 = por %p224, %p225
      %p228 = scmp.ne.s32.totalorder %s211, %s227
      %p229 = scmp.eq.s32.totalorder %s26, 0
      %p230 = por %p228, %p229
      %s231 = ssub.s32 %s27, %s39
      %p232 = scmp.eq.s32.totalorder %s231, 0
      %s234 = sadd.s32 %s233, 1
      %s235 = scalar_select %p232, %s233, %s234
      %p238 = pneg %p232
      %p239 = scmp.eq.s32.totalorder %s20, 3
      %p240 = por %p238, %p239
      %p241 = scmp.ne.s32.totalorder %s233, %s236
      %p242 = scmp.eq.s32.totalorder %s20, 0
      %p243 = por %p241, %p242
      %p244 = scmp.ne.s32.totalorder %s233, %s236
      %p245 = scmp.eq.s32.totalorder %s25, 3
      %p246 = por %p244, %p245
      %p247 = scmp.ne.s32.totalorder %s236, %s237
      %p248 = scmp.eq.s32.totalorder %s25, 0
      %p249 = por %p247, %p248
      %p250 = scmp.ne.s32.totalorder %s236, %s237
      %p251 = scmp.eq.s32.totalorder %s26, 3
      %p252 = por %p250, %p251
      %p254 = scmp.ne.s32.totalorder %s237, %s253
      %p255 = scmp.eq.s32.totalorder %s26, 0
      %p256 = por %p254, %p255
      %p257 = scmp.le.s32.totalorder 1, %s20
      %p258 = scmp.lt.s32.totalorder %s20, 5
      %p259 = pnand %p257, %p258
      %p260 = pneg %p259
      // Predicated region
      $region9: #{tpu_custom_call.1} parent=5 // pred_check
        _
      $region10: #{tpu_custom_call.1} parent=5 // pred_check_branch
        %262 = sbr.rel (%p259) target = $region12
      $region11: #{tpu_custom_call.1} parent=5 // pred_region
        %s263 = ssub.s32 %s20, 1
        // Predicated region
        $region13: #{tpu_custom_call.1} parent=11 // pred_check
          %p264 = pneg %p153
        $region14: #{tpu_custom_call.1} parent=11 // pred_check_branch
          %266 = sbr.rel (%p264) target = $region16
        $region15: #{tpu_custom_call.1} parent=11 // pred_region
          _
        $region16: #{tpu_custom_call.1} parent=11 // pred_fallthru
          _
        // Predicated region
        $region17: #{tpu_custom_call.1} parent=11 // pred_check
          %p267 = pneg %p174
        $region18: #{tpu_custom_call.1} parent=11 // pred_check_branch
          %269 = sbr.rel (%p267) target = $region20
        $region19: #{tpu_custom_call.1} parent=11 // pred_region
          _
        $region20: #{tpu_custom_call.1} parent=11 // pred_fallthru
          _
        // Predicated region
        $region21: #{tpu_custom_call.1} parent=11 // pred_check
          %p270 = pneg %p195
        $region22: #{tpu_custom_call.1} parent=11 // pred_check_branch
          %272 = sbr.rel (%p270) target = $region24
        $region23: #{tpu_custom_call.1} parent=11 // pred_region
          _
        $region24: #{tpu_custom_call.1} parent=11 // pred_fallthru
          _
      $region12: #{tpu_custom_call.1} parent=5 // pred_fallthru
        _
      %p273 = scmp.lt.s32.totalorder %s20, 4
      // Predicated region
      $region25: #{tpu_custom_call.1} parent=5 // pred_check
        %p274 = pneg %p273
      $region26: #{tpu_custom_call.1} parent=5 // pred_check_branch
        %276 = sbr.rel (%p274) target = $region28
      $region27: #{tpu_custom_call.1} parent=5 // pred_region
        // Predicated region
        $region29: #{tpu_custom_call.1} parent=27 // pred_check
          %p277 = pneg %p54
        $region30: #{tpu_custom_call.1} parent=27 // pred_check_branch
          %279 = sbr.rel (%p277) target = $region32
        $region31: #{tpu_custom_call.1} parent=27 // pred_region
          %s280 = smul.u32 8, %s28
          %p281 = scmp.lt.s32.totalorder %s27, 1
          %s282 = scalar_select %p281, %s27, 1
          %p283 = scmp.lt.s32.totalorder %s280, 15
          %s284 = scalar_select %p283, %s280, 15
          %s285 = smul.addr %s284, 2
          %s286 = smul.addr %s282, 32
          %s287 = sadd.s32 %s285, %s286
          %s288 = smul.addr %s287, 4
          %s289 = scalar_lea.vmem %s0, %s288
          %s290 = smul.u32 8, %s28
        $region32: #{tpu_custom_call.1} parent=27 // pred_fallthru
          _
        // Predicated region
        $region33: #{tpu_custom_call.1} parent=27 // pred_check
          %p291 = pneg %p90
        $region34: #{tpu_custom_call.1} parent=27 // pred_check_branch
          %293 = sbr.rel (%p291) target = $region36
        $region35: #{tpu_custom_call.1} parent=27 // pred_region
          %s294 = smul.u32 %s28, 8
          %s295 = ssub.s32 %s294, 1
          %p296 = scmp.gt.s32.totalorder %s295, 0
          %s297 = scalar_select %p296, %s295, 0
          %p298 = scmp.lt.s32.totalorder %s27, 1
          %s299 = scalar_select %p298, %s27, 1
          %p300 = scmp.lt.s32.totalorder %s297, 15
          %s301 = scalar_select %p300, %s297, 15
          %s302 = smul.addr %s301, 2
          %s303 = smul.addr %s299, 32
          %s304 = sadd.s32 %s302, %s303
          %s305 = smul.addr %s304, 4
          %s306 = scalar_lea.vmem %s1, %s305
          %s307 = smul.u32 %s28, 8
          %s308 = ssub.s32 %s307, 1
          %p309 = scmp.gt.s32.totalorder %s308, 0
          %s310 = scalar_select %p309, %s308, 0
        $region36: #{tpu_custom_call.1} parent=27 // pred_fallthru
          _
        // Predicated region
        $region37: #{tpu_custom_call.1} parent=27 // pred_check
          %p311 = pneg %p126
        $region38: #{tpu_custom_call.1} parent=27 // pred_check_branch
          %313 = sbr.rel (%p311) target = $region40
        $region39: #{tpu_custom_call.1} parent=27 // pred_region
          %s314 = sadd.s32 %s28, 1
          %s315 = smul.u32 %s314, 8
          %p316 = scmp.lt.s32.totalorder %s315, 15
          %s317 = scalar_select %p316, %s315, 15
          %p318 = scmp.lt.s32.totalorder %s27, 1
          %s319 = scalar_select %p318, %s27, 1
          %p320 = scmp.lt.s32.totalorder %s317, 15
          %s321 = scalar_select %p320, %s317, 15
          %s322 = smul.addr %s321, 2
          %s323 = smul.addr %s319, 32
          %s324 = sadd.s32 %s322, %s323
          %s325 = smul.addr %s324, 4
          %s326 = scalar_lea.vmem %s2, %s325
          %s327 = sadd.s32 %s28, 1
          %s328 = smul.u32 %s327, 8
          %p329 = scmp.lt.s32.totalorder %s328, 15
          %s330 = scalar_select %p329, %s328, 15
        $region40: #{tpu_custom_call.1} parent=27 // pred_fallthru
          _
      $region28: #{tpu_custom_call.1} parent=5 // pred_fallthru
        _
      %p331 = scmp.le.s32.totalorder 1, %s20
      %p332 = scmp.lt.s32.totalorder %s20, 5
      %p333 = pnand %p331, %p332
      %p334 = pneg %p333
      // Predicated region
      $region41: #{tpu_custom_call.1} parent=5 // pred_check
        _
      $region42: #{tpu_custom_call.1} parent=5 // pred_check_branch
        %336 = sbr.rel (%p333) target = $region44
      $region43: #{tpu_custom_call.1} parent=5 // pred_region
        %s337 = ssub.s32 %s20, 1
        %s338 = smul.u32 8, %s30
        %p339 = scmp.lt.s32.totalorder %s29, 1
        %s340 = scalar_select %p339, %s29, 1
        %p341 = scmp.lt.s32.totalorder %s338, 15
        %s342 = scalar_select %p341, %s338, 15
        %s343 = smul.addr %s342, 2
        %s344 = smul.addr %s340, 32
        %s345 = sadd.s32 %s343, %s344
        %s346 = smul.addr %s345, 4
        %s347 = scalar_lea.vmem %s0, %s346
        %p348 = pneg %p60
        %p349 = pneg %p57
        %s350 = smul.u32 %s30, 8
        %s351 = ssub.s32 %s350, 1
        %p352 = scmp.gt.s32.totalorder %s351, 0
        %s353 = scalar_select %p352, %s351, 0
        %p354 = scmp.lt.s32.totalorder %s29, 1
        %s355 = scalar_select %p354, %s29, 1
        %p356 = scmp.lt.s32.totalorder %s353, 15
        %s357 = scalar_select %p356, %s353, 15
        %s358 = smul.addr %s357, 2
        %s359 = smul.addr %s355, 32
        %s360 = sadd.s32 %s358, %s359
        %s361 = smul.addr %s360, 4
        %s362 = scalar_lea.vmem %s1, %s361
        %p363 = pneg %p96
        %p364 = pneg %p93
        %s365 = sadd.s32 %s30, 1
        %s366 = smul.u32 %s365, 8
        %p367 = scmp.lt.s32.totalorder %s366, 15
        %s368 = scalar_select %p367, %s366, 15
        %p369 = scmp.lt.s32.totalorder %s29, 1
        %s370 = scalar_select %p369, %s29, 1
        %p371 = scmp.lt.s32.totalorder %s368, 15
        %s372 = scalar_select %p371, %s368, 15
        %s373 = smul.addr %s372, 2
        %s374 = smul.addr %s370, 32
        %s375 = sadd.s32 %s373, %s374
        %s376 = smul.addr %s375, 4
        %s377 = scalar_lea.vmem %s2, %s376
        %p378 = pneg %p132
        %p379 = pneg %p129
        %p380 = pneg %p153
        %p381 = pneg %p150
        %p382 = pneg %p174
        %p383 = pneg %p171
        %p384 = pneg %p195
        %p385 = pneg %p192
        %p386 = pneg %p223
        %p387 = pneg %p220
        %s388 = sand.u32 %s210, 1
        %s389 = scalar_lea.sflag [#allocation5], %s388
        %s390 = sand.u32 %s210, 1
        %s391 = smul.addr %s390, 64
        %s392 = scalar_lea.vmem [#allocation4], %s391
        %p393 = pneg %p249
        %p394 = pneg %p246
        %s395 = sand.u32 %s236, 1
        %s396 = scalar_lea.sflag [#allocation7], %s395
        %s397 = sand.u32 %s236, 1
        %s398 = smul.addr %s397, 2
        %s399 = scalar_lea.vmem [#allocation6], %s398
        %s400 = smul.u32 8, %s30
        %p401 = scmp.lt.s32.totalorder %s29, 1
        %s402 = scalar_select %p401, %s29, 1
        %p403 = scmp.lt.s32.totalorder %s400, 15
        %s404 = scalar_select %p403, %s400, 15
        %s405 = smul.addr %s404, 2
        %s406 = smul.addr %s402, 32
        %s407 = sadd.s32 %s405, %s406
        %s408 = smul.addr %s407, 4
        %s409 = scalar_lea.vmem %s0, %s408
        %s410 = smul.u32 8, %s30
        %s411 = smul.u32 %s30, 8
        %s412 = ssub.s32 %s411, 1
        %p413 = scmp.gt.s32.totalorder %s412, 0
        %s414 = scalar_select %p413, %s412, 0
        %p415 = scmp.lt.s32.totalorder %s29, 1
        %s416 = scalar_select %p415, %s29, 1
        %p417 = scmp.lt.s32.totalorder %s414, 15
        %s418 = scalar_select %p417, %s414, 15
        %s419 = smul.addr %s418, 2
        %s420 = smul.addr %s416, 32
        %s421 = sadd.s32 %s419, %s420
        %s422 = smul.addr %s421, 4
        %s423 = scalar_lea.vmem %s1, %s422
        %s424 = smul.u32 %s30, 8
        %s425 = ssub.s32 %s424, 1
        %p426 = scmp.gt.s32.totalorder %s425, 0
        %s427 = scalar_select %p426, %s425, 0
        %s428 = sadd.s32 %s30, 1
        %s429 = smul.u32 %s428, 8
        %p430 = scmp.lt.s32.totalorder %s429, 15
        %s431 = scalar_select %p430, %s429, 15
        %p432 = scmp.lt.s32.totalorder %s29, 1
        %s433 = scalar_select %p432, %s29, 1
        %p434 = scmp.lt.s32.totalorder %s431, 15
        %s435 = scalar_select %p434, %s431, 15
        %s436 = smul.addr %s435, 2
        %s437 = smul.addr %s433, 32
        %s438 = sadd.s32 %s436, %s437
        %s439 = smul.addr %s438, 4
        %s440 = scalar_lea.vmem %s2, %s439
        %s441 = sadd.s32 %s30, 1
        %s442 = smul.u32 %s441, 8
        %p443 = scmp.lt.s32.totalorder %s442, 15
        %s444 = scalar_select %p443, %s442, 15
        %s445 = smul.u32 8, %s30
        %vm447 = vcmask 57344
        %vm448 = vsmask.f32 256
        %vm449 = vmand %vm447, %vm448
        %v450 = vld [vmem:[#allocation2] sm:$0x1]
        %v451 = vsel %vm449, 0, %v450
        %452 = vst [vmem:[#allocation2] sm:$0x1] %v451
        %v453 = vld [vmem:[#allocation2 + $0xc] sm:$0x1]
        %v454 = vsel %vm449, 0, %v453
        %455 = vst [vmem:[#allocation2 + $0xc] sm:$0x1] %v454
        %v456 = vld [vmem:[#allocation2 + $0x18] sm:$0x1]
        %v457 = vsel %vm449, 0, %v456
        %458 = vst [vmem:[#allocation2 + $0x18] sm:$0x1] %v457
        %v459 = vld [vmem:[#allocation2 + $0x24] sm:$0x1]
        %v460 = vsel %vm449, 0, %v459
        %461 = vst [vmem:[#allocation2 + $0x24] sm:$0x1] %v460
        %v462 = vld [vmem:[#allocation2 + $0x30] sm:$0x1]
        %v463 = vsel %vm449, 0, %v462
        %464 = vst [vmem:[#allocation2 + $0x30] sm:$0x1] %v463
        %v465 = vld [vmem:[#allocation2 + $0x3c] sm:$0x1]
        %v466 = vsel %vm449, 0, %v465
        %467 = vst [vmem:[#allocation2 + $0x3c] sm:$0x1] %v466
        %v468 = vld [vmem:[#allocation2 + $0x48] sm:$0x1]
        %v469 = vsel %vm449, 0, %v468
        %470 = vst [vmem:[#allocation2 + $0x48] sm:$0x1] %v469
        %v471 = vld [vmem:[#allocation2 + $0x54] sm:$0x1]
        %v472 = vsel %vm449, 0, %v471
        %473 = vst [vmem:[#allocation2 + $0x54] sm:$0x1] %v472
        %v474 = vld [vmem:[#allocation2 + $0x60] sm:$0x1]
        %v475 = vsel %vm449, 0, %v474
        %476 = vst [vmem:[#allocation2 + $0x60] sm:$0x1] %v475
        %v477 = vld [vmem:[#allocation2 + $0x6c] sm:$0x1]
        %v478 = vsel %vm449, 0, %v477
        %479 = vst [vmem:[#allocation2 + $0x6c] sm:$0x1] %v478
        %vm480 = vsmask.f32 7938
        %vm481 = vmand %vm447, %vm480
        %v482 = vld [vmem:[#allocation2 + $0x8] sm:$0x1]
        %v483 = vsel %vm481, 0, %v482
        %484 = vst [vmem:[#allocation2 + $0x8] sm:$0x1] %v483
        %v485 = vld [vmem:[#allocation2 + $0x14] sm:$0x1]
        %v486 = vsel %vm481, 0, %v485
        %487 = vst [vmem:[#allocation2 + $0x14] sm:$0x1] %v486
        %v488 = vld [vmem:[#allocation2 + $0x20] sm:$0x1]
        %v489 = vsel %vm481, 0, %v488
        %490 = vst [vmem:[#allocation2 + $0x20] sm:$0x1] %v489
        %v491 = vld [vmem:[#allocation2 + $0x2c] sm:$0x1]
        %v492 = vsel %vm481, 0, %v491
        %493 = vst [vmem:[#allocation2 + $0x2c] sm:$0x1] %v492
        %v494 = vld [vmem:[#allocation2 + $0x38] sm:$0x1]
        %v495 = vsel %vm481, 0, %v494
        %496 = vst [vmem:[#allocation2 + $0x38] sm:$0x1] %v495
        %v497 = vld [vmem:[#allocation2 + $0x44] sm:$0x1]
        %v498 = vsel %vm481, 0, %v497
        %499 = vst [vmem:[#allocation2 + $0x44] sm:$0x1] %v498
        %v500 = vld [vmem:[#allocation2 + $0x50] sm:$0x1]
        %v501 = vsel %vm481, 0, %v500
        %502 = vst [vmem:[#allocation2 + $0x50] sm:$0x1] %v501
        %v503 = vld [vmem:[#allocation2 + $0x5c] sm:$0x1]
        %v504 = vsel %vm481, 0, %v503
        %505 = vst [vmem:[#allocation2 + $0x5c] sm:$0x1] %v504
        %v506 = vld [vmem:[#allocation2 + $0x68] sm:$0x1]
        %v507 = vsel %vm481, 0, %v506
        %508 = vst [vmem:[#allocation2 + $0x68] sm:$0x1] %v507
        %v509 = vld [vmem:[#allocation2 + $0x74] sm:$0x1]
        %v510 = vsel %vm481, 0, %v509
        %511 = vst [vmem:[#allocation2 + $0x74] sm:$0x1] %v510
        %v512 = vld [vmem:[%s409] sm:$0xf]
        %v513 = vld [vmem:[%s409 + $0x4] sm:$0xf]
        %v514 = vld [vmem:[%s409 + $0x8] sm:$0xf]
        %v515 = vld [vmem:[%s409 + $0xc] sm:$0xf]
        %v516 = vld [vmem:[%s409 + $0x10] sm:$0xf]
        %v517 = vld [vmem:[%s409 + $0x14] sm:$0xf]
        %v518 = vld [vmem:[%s409 + $0x18] sm:$0xf]
        %v519 = vld [vmem:[%s409 + $0x1c] sm:$0xf]
        %v520 = vld [vmem:[%s409 + $0x20] sm:$0xf]
        %v521 = vld [vmem:[%s409 + $0x24] sm:$0xf]
        %v522 = vld [vmem:[%s409 + $0x28] sm:$0xf]
        %v523 = vld [vmem:[%s409 + $0x2c] sm:$0xf]
        %v524 = vld [vmem:[%s409 + $0x30] sm:$0xf]
        %v525 = vld [vmem:[%s409 + $0x34] sm:$0xf]
        %v526 = vld [vmem:[%s409 + $0x38] sm:$0xf]
        %v527 = vld [vmem:[%s409 + $0x3c] sm:$0xf]
        %vm528 = vsmask.f32 4368
        %vm529 = vmor %vm448, %vm528
        %v531 = vshrl.u32 %v512, 16
        %v533 = vrot.slane %v531, 7
        %v534 = vshll.u32 %v512, 16
        %v536 = vor.u32 %v533, %v534
        %v537 = vrot.slane %v533, 4
        %v539 = vshrl.u32 %v513, 16
        %v541 = vrot.slane %v539, 7
        %v542 = vshll.u32 %v513, 16
        %v544 = vor.u32 %v541, %v542
        %v545 = vsel %vm529, %v537, %v544
        %v546 = vrot.slane %v541, 4
        %v548 = vshrl.u32 %v514, 16
        %v550 = vrot.slane %v548, 7
        %v551 = vshll.u32 %v514, 16
        %v553 = vor.u32 %v550, %v551
        %v554 = vrot.slane %v550, 4
        %v556 = vshrl.u32 %v515, 16
        %v558 = vrot.slane %v556, 7
        %v559 = vshll.u32 %v515, 16
        %v561 = vor.u32 %v558, %v559
        %v562 = vsel %vm529, %v554, %v561
        %v563 = vrot.slane %v558, 4
        %v565 = vshrl.u32 %v516, 16
        %v567 = vrot.slane %v565, 7
        %v568 = vshll.u32 %v516, 16
        %v570 = vor.u32 %v567, %v568
        %v571 = vrot.slane %v567, 4
        %v573 = vshrl.u32 %v517, 16
        %v575 = vrot.slane %v573, 7
        %v576 = vshll.u32 %v517, 16
        %v578 = vor.u32 %v575, %v576
        %v579 = vsel %vm529, %v571, %v578
        %v580 = vrot.slane %v575, 4
        %v582 = vshrl.u32 %v518, 16
        %v584 = vrot.slane %v582, 7
        %v585 = vshll.u32 %v518, 16
        %v587 = vor.u32 %v584, %v585
        %v588 = vrot.slane %v584, 4
        %v590 = vshrl.u32 %v519, 16
        %v592 = vrot.slane %v590, 7
        %v593 = vshll.u32 %v519, 16
        %v595 = vor.u32 %v592, %v593
        %v596 = vsel %vm529, %v588, %v595
        %v597 = vrot.slane %v592, 4
        %v599 = vshrl.u32 %v520, 16
        %v601 = vrot.slane %v599, 7
        %v602 = vshll.u32 %v520, 16
        %v604 = vor.u32 %v601, %v602
        %v605 = vrot.slane %v601, 4
        %v607 = vshrl.u32 %v521, 16
        %v609 = vrot.slane %v607, 7
        %v610 = vshll.u32 %v521, 16
        %v612 = vor.u32 %v609, %v610
        %v613 = vsel %vm529, %v605, %v612
        %v614 = vrot.slane %v609, 4
        %v616 = vshrl.u32 %v522, 16
        %v618 = vrot.slane %v616, 7
        %v619 = vshll.u32 %v522, 16
        %v621 = vor.u32 %v618, %v619
        %v622 = vrot.slane %v618, 4
        %v624 = vshrl.u32 %v523, 16
        %v626 = vrot.slane %v624, 7
        %v627 = vshll.u32 %v523, 16
        %v629 = vor.u32 %v626, %v627
        %v630 = vsel %vm529, %v622, %v629
        %v631 = vrot.slane %v626, 4
        %v633 = vshrl.u32 %v524, 16
        %v635 = vrot.slane %v633, 7
        %v636 = vshll.u32 %v524, 16
        %v638 = vor.u32 %v635, %v636
        %v639 = vrot.slane %v635, 4
        %v641 = vshrl.u32 %v525, 16
        %v643 = vrot.slane %v641, 7
        %v644 = vshll.u32 %v525, 16
        %v646 = vor.u32 %v643, %v644
        %v647 = vsel %vm529, %v639, %v646
        %v648 = vrot.slane %v643, 4
        %v650 = vshrl.u32 %v526, 16
        %v652 = vrot.slane %v650, 7
        %v653 = vshll.u32 %v526, 16
        %v655 = vor.u32 %v652, %v653
        %v656 = vrot.slane %v652, 4
        %v658 = vshrl.u32 %v527, 16
        %v660 = vrot.slane %v658, 7
        %v661 = vshll.u32 %v527, 16
        %v663 = vor.u32 %v660, %v661
        %v664 = vsel %vm529, %v656, %v663
        %v665 = vrot.slane %v660, 4
        %s690 = scalar_lea.vmem [#allocation2], 12
        %vm691 = vcmask 60416
        %vm692 = vmand %vm691, %vm480
        %v693 = vld [vmem:[%s690] sm:$0xf]
        %v694 = vsel %vm692, %v536, %v693
        %695 = vst [vmem:[%s690] sm:$0xf] %v694
        %vm696 = vcmask 60416
        %697 = vst.msk [vmem:[%s690 + $0x4] sm:$0xf] %vm696, %v545
        %v698 = vld [vmem:[%s690 + $0x8] sm:$0x1]
        %v699 = vsel %vm449, %v546, %v698
        %700 = vst [vmem:[%s690 + $0x8] sm:$0x1] %v699
        %v701 = vld [vmem:[%s690 + $0xc] sm:$0xf]
        %v702 = vsel %vm692, %v553, %v701
        %703 = vst [vmem:[%s690 + $0xc] sm:$0xf] %v702
        %704 = vst.msk [vmem:[%s690 + $0x10] sm:$0xf] %vm696, %v562
        %v705 = vld [vmem:[%s690 + $0x14] sm:$0x1]
        %v706 = vsel %vm449, %v563, %v705
        %707 = vst [vmem:[%s690 + $0x14] sm:$0x1] %v706
        %v708 = vld [vmem:[%s690 + $0x18] sm:$0xf]
        %v709 = vsel %vm692, %v570, %v708
        %710 = vst [vmem:[%s690 + $0x18] sm:$0xf] %v709
        %711 = vst.msk [vmem:[%s690 + $0x1c] sm:$0xf] %vm696, %v579
        %v712 = vld [vmem:[%s690 + $0x20] sm:$0x1]
        %v713 = vsel %vm449, %v580, %v712
        %714 = vst [vmem:[%s690 + $0x20] sm:$0x1] %v713
        %v715 = vld [vmem:[%s690 + $0x24] sm:$0xf]
        %v716 = vsel %vm692, %v587, %v715
        %717 = vst [vmem:[%s690 + $0x24] sm:$0xf] %v716
        %718 = vst.msk [vmem:[%s690 + $0x28] sm:$0xf] %vm696, %v596
        %v719 = vld [vmem:[%s690 + $0x2c] sm:$0x1]
        %v720 = vsel %vm449, %v597, %v719
        %721 = vst [vmem:[%s690 + $0x2c] sm:$0x1] %v720
        %v722 = vld [vmem:[%s690 + $0x30] sm:$0xf]
        %v723 = vsel %vm692, %v604, %v722
        %724 = vst [vmem:[%s690 + $0x30] sm:$0xf] %v723
        %725 = vst.msk [vmem:[%s690 + $0x34] sm:$0xf] %vm696, %v613
        %v726 = vld [vmem:[%s690 + $0x38] sm:$0x1]
        %v727 = vsel %vm449, %v614, %v726
        %728 = vst [vmem:[%s690 + $0x38] sm:$0x1] %v727
        %v729 = vld [vmem:[%s690 + $0x3c] sm:$0xf]
        %v730 = vsel %vm692, %v621, %v729
        %731 = vst [vmem:[%s690 + $0x3c] sm:$0xf] %v730
        %732 = vst.msk [vmem:[%s690 + $0x40] sm:$0xf] %vm696, %v630
        %v733 = vld [vmem:[%s690 + $0x44] sm:$0x1]
        %v734 = vsel %vm449, %v631, %v733
        %735 = vst [vmem:[%s690 + $0x44] sm:$0x1] %v734
        %v736 = vld [vmem:[%s690 + $0x48] sm:$0xf]
        %v737 = vsel %vm692, %v638, %v736
        %738 = vst [vmem:[%s690 + $0x48] sm:$0xf] %v737
        %739 = vst.msk [vmem:[%s690 + $0x4c] sm:$0xf] %vm696, %v647
        %v740 = vld [vmem:[%s690 + $0x50] sm:$0x1]
        %v741 = vsel %vm449, %v648, %v740
        %742 = vst [vmem:[%s690 + $0x50] sm:$0x1] %v741
        %v743 = vld [vmem:[%s690 + $0x54] sm:$0xf]
        %v744 = vsel %vm692, %v655, %v743
        %745 = vst [vmem:[%s690 + $0x54] sm:$0xf] %v744
        %746 = vst.msk [vmem:[%s690 + $0x58] sm:$0xf] %vm696, %v664
        %v747 = vld [vmem:[%s690 + $0x5c] sm:$0x1]
        %v748 = vsel %vm449, %v665, %v747
        %749 = vst [vmem:[%s690 + $0x5c] sm:$0x1] %v748
        %v750 = vld [vmem:[%s423] sm:$0xf]
        %v751 = vld [vmem:[%s423 + $0x4] sm:$0xf]
        %v753 = vshrl.u32 %v750, 16
        %v755 = vrot.slane %v753, 7
        %v756 = vshll.u32 %v750, 16
        %v758 = vor.u32 %v755, %v756
        %v759 = vrot.slane %v755, 4
        %v761 = vshrl.u32 %v751, 16
        %v763 = vrot.slane %v761, 7
        %v764 = vshll.u32 %v751, 16
        %v766 = vor.u32 %v763, %v764
        %v767 = vsel %vm529, %v759, %v766
        %v768 = vrot.slane %v763, 4
        %v772 = vld [vmem:[#allocation2] sm:$0xf]
        %v773 = vsel %vm692, %v758, %v772
        %774 = vst [vmem:[#allocation2] sm:$0xf] %v773
        %775 = vst.msk [vmem:[#allocation2 + $0x4] sm:$0xf] %vm696, %v767
        %v776 = vld [vmem:[#allocation2 + $0x8] sm:$0x1]
        %v777 = vsel %vm449, %v768, %v776
        %778 = vst [vmem:[#allocation2 + $0x8] sm:$0x1] %v777
        %v779 = vld [vmem:[%s440] sm:$0xf]
        %v780 = vld [vmem:[%s440 + $0x4] sm:$0xf]
        %v782 = vshrl.u32 %v779, 16
        %v784 = vrot.slane %v782, 7
        %v785 = vshll.u32 %v779, 16
        %v787 = vor.u32 %v784, %v785
        %v788 = vrot.slane %v784, 4
        %v790 = vshrl.u32 %v780, 16
        %v792 = vrot.slane %v790, 7
        %v793 = vshll.u32 %v780, 16
        %v795 = vor.u32 %v792, %v793
        %v796 = vsel %vm529, %v788, %v795
        %v797 = vrot.slane %v792, 4
        %s801 = scalar_lea.vmem [#allocation2], 108
        %v802 = vld [vmem:[%s801] sm:$0xf]
        %v803 = vsel %vm692, %v787, %v802
        %804 = vst [vmem:[%s801] sm:$0xf] %v803
        %805 = vst.msk [vmem:[%s801 + $0x4] sm:$0xf] %vm696, %v796
        %v806 = vld [vmem:[%s801 + $0x8] sm:$0x1]
        %v807 = vsel %vm449, %v797, %v806
        %808 = vst [vmem:[%s801 + $0x8] sm:$0x1] %v807
        %p809 = scmp.eq.s32.totalorder %s30, 0
        // Predicated region
        $region45: #{tpu_custom_call.1} parent=43 // pred_check
          %p810 = pneg %p809
        $region46: #{tpu_custom_call.1} parent=43 // pred_check_branch
          %812 = sbr.rel (%p810) target = $region48
        $region47: #{tpu_custom_call.1} parent=43 // pred_region
          %v813 = vld [vmem:[#allocation2] sm:$0xf]
          %v814 = vsel %vm692, 0, %v813
          %815 = vst [vmem:[#allocation2] sm:$0xf] %v814
          %816 = vst.msk [vmem:[#allocation2 + $0x4] sm:$0xf] %vm696, 0
          %v817 = vld [vmem:[#allocation2 + $0x8] sm:$0x1]
          %v818 = vsel %vm449, 0, %v817
          %819 = vst [vmem:[#allocation2 + $0x8] sm:$0x1] %v818
        $region48: #{tpu_custom_call.1} parent=43 // pred_fallthru
          _
        %p820 = scmp.eq.s32.totalorder %s30, 1
        // Predicated region
        $region49: #{tpu_custom_call.1} parent=43 // pred_check
          %p821 = pneg %p820
        $region50: #{tpu_custom_call.1} parent=43 // pred_check_branch
          %823 = sbr.rel (%p821) target = $region52
        $region51: #{tpu_custom_call.1} parent=43 // pred_region
          %v824 = vld [vmem:[%s801] sm:$0xf]
          %v825 = vsel %vm692, 0, %v824
          %826 = vst [vmem:[%s801] sm:$0xf] %v825
          %827 = vst.msk [vmem:[%s801 + $0x4] sm:$0xf] %vm696, 0
          %v828 = vld [vmem:[%s801 + $0x8] sm:$0x1]
          %v829 = vsel %vm449, 0, %v828
          %830 = vst [vmem:[%s801 + $0x8] sm:$0x1] %v829
        $region52: #{tpu_custom_call.1} parent=43 // pred_fallthru
          _
        %v831 = vld [vmem:[#allocation2] sm:$0xf]
        %v832 = vld [vmem:[#allocation2 + $0x4] sm:$0xf]
        %v833 = vld [vmem:[#allocation2 + $0xc] sm:$0xf]
        %v834 = vld [vmem:[#allocation2 + $0x10] sm:$0xf]
        %v835 = vld [vmem:[#allocation2 + $0x18] sm:$0xf]
        %v836 = vld [vmem:[#allocation2 + $0x1c] sm:$0xf]
        %v837 = vld [vmem:[#allocation2 + $0x24] sm:$0xf]
        %v838 = vld [vmem:[#allocation2 + $0x28] sm:$0xf]
        %v839 = vld [vmem:[#allocation2 + $0x30] sm:$0xf]
        %v840 = vld [vmem:[#allocation2 + $0x34] sm:$0xf]
        %v841 = vld [vmem:[#allocation2 + $0x3c] sm:$0xf]
        %v842 = vld [vmem:[#allocation2 + $0x40] sm:$0xf]
        %v843 = vld [vmem:[#allocation2 + $0x48] sm:$0xf]
        %v844 = vld [vmem:[#allocation2 + $0x4c] sm:$0xf]
        %v845 = vld [vmem:[#allocation2 + $0x54] sm:$0xf]
        %v846 = vld [vmem:[#allocation2 + $0x58] sm:$0xf]
        %v863 = vunpack.c.l.b16 %v831
        %v864 = vunpack.c.l.b16 %v832
        %v865 = vunpack.c.l.b16 %v833
        %v866 = vunpack.c.l.b16 %v834
        %v867 = vunpack.c.l.b16 %v835
        %v868 = vunpack.c.l.b16 %v836
        %v869 = vunpack.c.l.b16 %v837
        %v870 = vunpack.c.l.b16 %v838
        %v871 = vunpack.c.l.b16 %v839
        %v872 = vunpack.c.l.b16 %v840
        %v873 = vunpack.c.l.b16 %v841
        %v874 = vunpack.c.l.b16 %v842
        %v875 = vunpack.c.l.b16 %v843
        %v876 = vunpack.c.l.b16 %v844
        %v877 = vunpack.c.l.b16 %v845
        %v878 = vunpack.c.l.b16 %v846
        %v879 = vpack.c.b16 %v864, %v863
        %v880 = vpack.c.b16 %v866, %v865
        %v881 = vpack.c.b16 %v868, %v867
        %v882 = vpack.c.b16 %v870, %v869
        %v883 = vpack.c.b16 %v872, %v871
        %v884 = vpack.c.b16 %v874, %v873
        %v885 = vpack.c.b16 %v876, %v875
        %v886 = vpack.c.b16 %v878, %v877
        %vm895 = vcmask 64512
        %896 = vst.msk [vmem:[#allocation3] sm:$0xff] %vm895, %v879
        %897 = vst.msk [vmem:[#allocation3 + $0x8] sm:$0xff] %vm895, %v880
        %898 = vst.msk [vmem:[#allocation3 + $0x10] sm:$0xff] %vm895, %v881
        %899 = vst.msk [vmem:[#allocation3 + $0x18] sm:$0xff] %vm895, %v882
        %900 = vst.msk [vmem:[#allocation3 + $0x20] sm:$0xff] %vm895, %v883
        %901 = vst.msk [vmem:[#allocation3 + $0x28] sm:$0xff] %vm895, %v884
        %902 = vst.msk [vmem:[#allocation3 + $0x30] sm:$0xff] %vm895, %v885
        %903 = vst.msk [vmem:[#allocation3 + $0x38] sm:$0xff] %vm895, %v886
        %v904 = vld [vmem:[#allocation2] sm:$0xf]
        %v905 = vld [vmem:[#allocation2 + $0x4] sm:$0xf]
        %v906 = vld [vmem:[#allocation2 + $0x8] sm:$0x1]
        %v907 = vld [vmem:[#allocation2 + $0xc] sm:$0xf]
        %v908 = vld [vmem:[#allocation2 + $0x10] sm:$0xf]
        %v909 = vld [vmem:[#allocation2 + $0x14] sm:$0x1]
        %v910 = vld [vmem:[#allocation2 + $0x18] sm:$0xf]
        %v911 = vld [vmem:[#allocation2 + $0x1c] sm:$0xf]
        %v912 = vld [vmem:[#allocation2 + $0x20] sm:$0x1]
        %v913 = vld [vmem:[#allocation2 + $0x24] sm:$0xf]
        %v914 = vld [vmem:[#allocation2 + $0x28] sm:$0xf]
        %v915 = vld [vmem:[#allocation2 + $0x2c] sm:$0x1]
        %v916 = vld [vmem:[#allocation2 + $0x30] sm:$0xf]
        %v917 = vld [vmem:[#allocation2 + $0x34] sm:$0xf]
        %v918 = vld [vmem:[#allocation2 + $0x38] sm:$0x1]
        %v919 = vld [vmem:[#allocation2 + $0x3c] sm:$0xf]
        %v920 = vld [vmem:[#allocation2 + $0x40] sm:$0xf]
        %v921 = vld [vmem:[#allocation2 + $0x44] sm:$0x1]
        %v922 = vld [vmem:[#allocation2 + $0x48] sm:$0xf]
        %v923 = vld [vmem:[#allocation2 + $0x4c] sm:$0xf]
        %v924 = vld [vmem:[#allocation2 + $0x50] sm:$0x1]
        %v925 = vld [vmem:[#allocation2 + $0x54] sm:$0xf]
        %v926 = vld [vmem:[#allocation2 + $0x58] sm:$0xf]
        %v927 = vld [vmem:[#allocation2 + $0x5c] sm:$0x1]
        %vm928 = vsmask.f32 3328
        %vm929 = vsmask.f32 7440
        %vm930 = vmor %vm928, %vm929
        %v932 = vshrl.u32 %v904, 16
        %v934 = vrot.slane %v932, 4
        %v935 = vshll.u32 %v904, 16
        %v937 = vrot.slane %v935, 5
        %v938 = vor.u32 %v934, %v937
        %v939 = vrot.slane %v938, 4
        %v941 = vshll.u32 %v905, 16
        %v943 = vrot.slane %v941, 5
        %v944 = vsel %vm930, %v939, %v943
        %v945 = vshrl.u32 %v905, 16
        %v947 = vrot.slane %v945, 4
        %v948 = vor.u32 %v947, %v943
        %v949 = vrot.slane %v948, 4
        %v951 = vshll.u32 %v906, 16
        %v953 = vrot.slane %v951, 5
        %v954 = vsel %vm930, %v949, %v953
        %v956 = vshrl.u32 %v907, 16
        %v958 = vrot.slane %v956, 4
        %v959 = vshll.u32 %v907, 16
        %v961 = vrot.slane %v959, 5
        %v962 = vor.u32 %v958, %v961
        %v963 = vrot.slane %v962, 4
        %v965 = vshll.u32 %v908, 16
        %v967 = vrot.slane %v965, 5
        %v968 = vsel %vm930, %v963, %v967
        %v969 = vshrl.u32 %v908, 16
        %v971 = vrot.slane %v969, 4
        %v972 = vor.u32 %v971, %v967
        %v973 = vrot.slane %v972, 4
        %v975 = vshll.u32 %v909, 16
        %v977 = vrot.slane %v975, 5
        %v978 = vsel %vm930, %v973, %v977
        %v980 = vshrl.u32 %v910, 16
        %v982 = vrot.slane %v980, 4
        %v983 = vshll.u32 %v910, 16
        %v985 = vrot.slane %v983, 5
        %v986 = vor.u32 %v982, %v985
        %v987 = vrot.slane %v986, 4
        %v989 = vshll.u32 %v911, 16
        %v991 = vrot.slane %v989, 5
        %v992 = vsel %vm930, %v987, %v991
        %v993 = vshrl.u32 %v911, 16
        %v995 = vrot.slane %v993, 4
        %v996 = vor.u32 %v995, %v991
        %v997 = vrot.slane %v996, 4
        %v999 = vshll.u32 %v912, 16
        %v1001 = vrot.slane %v999, 5
        %v1002 = vsel %vm930, %v997, %v1001
        %v1004 = vshrl.u32 %v913, 16
        %v1006 = vrot.slane %v1004, 4
        %v1007 = vshll.u32 %v913, 16
        %v1009 = vrot.slane %v1007, 5
        %v1010 = vor.u32 %v1006, %v1009
        %v1011 = vrot.slane %v1010, 4
        %v1013 = vshll.u32 %v914, 16
        %v1015 = vrot.slane %v1013, 5
        %v1016 = vsel %vm930, %v1011, %v1015
        %v1017 = vshrl.u32 %v914, 16
        %v1019 = vrot.slane %v1017, 4
        %v1020 = vor.u32 %v1019, %v1015
        %v1021 = vrot.slane %v1020, 4
        %v1023 = vshll.u32 %v915, 16
        %v1025 = vrot.slane %v1023, 5
        %v1026 = vsel %vm930, %v1021, %v1025
        %v1028 = vshrl.u32 %v916, 16
        %v1030 = vrot.slane %v1028, 4
        %v1031 = vshll.u32 %v916, 16
        %v1033 = vrot.slane %v1031, 5
        %v1034 = vor.u32 %v1030, %v1033
        %v1035 = vrot.slane %v1034, 4
        %v1037 = vshll.u32 %v917, 16
        %v1039 = vrot.slane %v1037, 5
        %v1040 = vsel %vm930, %v1035, %v1039
        %v1041 = vshrl.u32 %v917, 16
        %v1043 = vrot.slane %v1041, 4
        %v1044 = vor.u32 %v1043, %v1039
        %v1045 = vrot.slane %v1044, 4
        %v1047 = vshll.u32 %v918, 16
        %v1049 = vrot.slane %v1047, 5
        %v1050 = vsel %vm930, %v1045, %v1049
        %v1052 = vshrl.u32 %v919, 16
        %v1054 = vrot.slane %v1052, 4
        %v1055 = vshll.u32 %v919, 16
        %v1057 = vrot.slane %v1055, 5
        %v1058 = vor.u32 %v1054, %v1057
        %v1059 = vrot.slane %v1058, 4
        %v1061 = vshll.u32 %v920, 16
        %v1063 = vrot.slane %v1061, 5
        %v1064 = vsel %vm930, %v1059, %v1063
        %v1065 = vshrl.u32 %v920, 16
        %v1067 = vrot.slane %v1065, 4
        %v1068 = vor.u32 %v1067, %v1063
        %v1069 = vrot.slane %v1068, 4
        %v1071 = vshll.u32 %v921, 16
        %v1073 = vrot.slane %v1071, 5
        %v1074 = vsel %vm930, %v1069, %v1073
        %v1076 = vshrl.u32 %v922, 16
        %v1078 = vrot.slane %v1076, 4
        %v1079 = vshll.u32 %v922, 16
        %v1081 = vrot.slane %v1079, 5
        %v1082 = vor.u32 %v1078, %v1081
        %v1083 = vrot.slane %v1082, 4
        %v1085 = vshll.u32 %v923, 16
        %v1087 = vrot.slane %v1085, 5
        %v1088 = vsel %vm930, %v1083, %v1087
        %v1089 = vshrl.u32 %v923, 16
        %v1091 = vrot.slane %v1089, 4
        %v1092 = vor.u32 %v1091, %v1087
        %v1093 = vrot.slane %v1092, 4
        %v1095 = vshll.u32 %v924, 16
        %v1097 = vrot.slane %v1095, 5
        %v1098 = vsel %vm930, %v1093, %v1097
        %v1100 = vshrl.u32 %v925, 16
        %v1102 = vrot.slane %v1100, 4
        %v1103 = vshll.u32 %v925, 16
        %v1105 = vrot.slane %v1103, 5
        %v1106 = vor.u32 %v1102, %v1105
        %v1107 = vrot.slane %v1106, 4
        %v1109 = vshll.u32 %v926, 16
        %v1111 = vrot.slane %v1109, 5
        %v1112 = vsel %vm930, %v1107, %v1111
        %v1113 = vshrl.u32 %v926, 16
        %v1115 = vrot.slane %v1113, 4
        %v1116 = vor.u32 %v1115, %v1111
        %v1117 = vrot.slane %v1116, 4
        %v1119 = vshll.u32 %v927, 16
        %v1121 = vrot.slane %v1119, 5
        %v1122 = vsel %vm930, %v1117, %v1121
        %v1123 = vunpack.c.l.b16 %v944
        %v1124 = vunpack.c.l.b16 %v954
        %v1125 = vunpack.c.l.b16 %v968
        %v1126 = vunpack.c.l.b16 %v978
        %v1127 = vunpack.c.l.b16 %v992
        %v1128 = vunpack.c.l.b16 %v1002
        %v1129 = vunpack.c.l.b16 %v1016
        %v1130 = vunpack.c.l.b16 %v1026
        %v1131 = vunpack.c.l.b16 %v1040
        %v1132 = vunpack.c.l.b16 %v1050
        %v1133 = vunpack.c.l.b16 %v1064
        %v1134 = vunpack.c.l.b16 %v1074
        %v1135 = vunpack.c.l.b16 %v1088
        %v1136 = vunpack.c.l.b16 %v1098
        %v1137 = vunpack.c.l.b16 %v1112
        %v1138 = vunpack.c.l.b16 %v1122
        %v1139 = vpack.c.b16 %v1124, %v1123
        %v1140 = vpack.c.b16 %v1126, %v1125
        %v1141 = vpack.c.b16 %v1128, %v1127
        %v1142 = vpack.c.b16 %v1130, %v1129
        %v1143 = vpack.c.b16 %v1132, %v1131
        %v1144 = vpack.c.b16 %v1134, %v1133
        %v1145 = vpack.c.b16 %v1136, %v1135
        %v1146 = vpack.c.b16 %v1138, %v1137
        %1147 = vrot.lane.b32.xlu0 %v1139, 8
        %v1148 = vpop.permute.xlu0 %1147
        %1149 = vrot.lane.b32.xlu0 %v1140, 8
        %v1150 = vpop.permute.xlu0 %1149
        %1151 = vrot.lane.b32.xlu0 %v1141, 8
        %v1152 = vpop.permute.xlu0 %1151
        %1153 = vrot.lane.b32.xlu0 %v1142, 8
        %v1154 = vpop.permute.xlu0 %1153
        %1155 = vrot.lane.b32.xlu0 %v1143, 8
        %v1156 = vpop.permute.xlu0 %1155
        %1157 = vrot.lane.b32.xlu0 %v1144, 8
        %v1158 = vpop.permute.xlu0 %1157
        %1159 = vrot.lane.b32.xlu0 %v1145, 8
        %v1160 = vpop.permute.xlu0 %1159
        %1161 = vrot.lane.b32.xlu0 %v1146, 8
        %v1162 = vpop.permute.xlu0 %1161
        %vm1171 = vcmask 130112
        %1172 = vst.msk [vmem:[#allocation3] sm:$0xff] %vm1171, %v1148
        %1173 = vst.msk [vmem:[#allocation3 + $0x8] sm:$0xff] %vm1171, %v1150
        %1174 = vst.msk [vmem:[#allocation3 + $0x10] sm:$0xff] %vm1171, %v1152
        %1175 = vst.msk [vmem:[#allocation3 + $0x18] sm:$0xff] %vm1171, %v1154
        %1176 = vst.msk [vmem:[#allocation3 + $0x20] sm:$0xff] %vm1171, %v1156
        %1177 = vst.msk [vmem:[#allocation3 + $0x28] sm:$0xff] %vm1171, %v1158
        %1178 = vst.msk [vmem:[#allocation3 + $0x30] sm:$0xff] %vm1171, %v1160
        %1179 = vst.msk [vmem:[#allocation3 + $0x38] sm:$0xff] %vm1171, %v1162
        %v1180 = vld [vmem:[#allocation2] sm:$0xe]
        %v1181 = vld [vmem:[#allocation2 + $0x4] sm:$0xf]
        %v1182 = vld [vmem:[#allocation2 + $0x8] sm:$0x1]
        %v1183 = vld [vmem:[#allocation2 + $0xc] sm:$0xe]
        %v1184 = vld [vmem:[#allocation2 + $0x10] sm:$0xf]
        %v1185 = vld [vmem:[#allocation2 + $0x14] sm:$0x1]
        %v1186 = vld [vmem:[#allocation2 + $0x18] sm:$0xe]
        %v1187 = vld [vmem:[#allocation2 + $0x1c] sm:$0xf]
        %v1188 = vld [vmem:[#allocation2 + $0x20] sm:$0x1]
        %v1189 = vld [vmem:[#allocation2 + $0x24] sm:$0xe]
        %v1190 = vld [vmem:[#allocation2 + $0x28] sm:$0xf]
        %v1191 = vld [vmem:[#allocation2 + $0x2c] sm:$0x1]
        %v1192 = vld [vmem:[#allocation2 + $0x30] sm:$0xe]
        %v1193 = vld [vmem:[#allocation2 + $0x34] sm:$0xf]
        %v1194 = vld [vmem:[#allocation2 + $0x38] sm:$0x1]
        %v1195 = vld [vmem:[#allocation2 + $0x3c] sm:$0xe]
        %v1196 = vld [vmem:[#allocation2 + $0x40] sm:$0xf]
        %v1197 = vld [vmem:[#allocation2 + $0x44] sm:$0x1]
        %v1198 = vld [vmem:[#allocation2 + $0x48] sm:$0xe]
        %v1199 = vld [vmem:[#allocation2 + $0x4c] sm:$0xf]
        %v1200 = vld [vmem:[#allocation2 + $0x50] sm:$0x1]
        %v1201 = vld [vmem:[#allocation2 + $0x54] sm:$0xe]
        %v1202 = vld [vmem:[#allocation2 + $0x58] sm:$0xf]
        %v1203 = vld [vmem:[#allocation2 + $0x5c] sm:$0x1]
        %vm1228 = vcmask 1042432
        %vm1229 = vcmask 1046532
        %vm1230 = vmor %vm1228, %vm1229
        %v1231 = vrot.slane %v1180, 5
        %v1232 = vrot.slane %v1231, 4
        %v1233 = vrot.slane %v1181, 5
        %v1234 = vsel %vm1230, %v1232, %v1233
        %v1235 = vrot.slane %v1233, 4
        %v1236 = vrot.slane %v1182, 5
        %v1237 = vsel %vm1230, %v1235, %v1236
        %v1238 = vrot.slane %v1183, 5
        %v1239 = vrot.slane %v1238, 4
        %v1240 = vrot.slane %v1184, 5
        %v1241 = vsel %vm1230, %v1239, %v1240
        %v1242 = vrot.slane %v1240, 4
        %v1243 = vrot.slane %v1185, 5
        %v1244 = vsel %vm1230, %v1242, %v1243
        %v1245 = vrot.slane %v1186, 5
        %v1246 = vrot.slane %v1245, 4
        %v1247 = vrot.slane %v1187, 5
        %v1248 = vsel %vm1230, %v1246, %v1247
        %v1249 = vrot.slane %v1247, 4
        %v1250 = vrot.slane %v1188, 5
        %v1251 = vsel %vm1230, %v1249, %v1250
        %v1252 = vrot.slane %v1189, 5
        %v1253 = vrot.slane %v1252, 4
        %v1254 = vrot.slane %v1190, 5
        %v1255 = vsel %vm1230, %v1253, %v1254
        %v1256 = vrot.slane %v1254, 4
        %v1257 = vrot.slane %v1191, 5
        %v1258 = vsel %vm1230, %v1256, %v1257
        %v1259 = vrot.slane %v1192, 5
        %v1260 = vrot.slane %v1259, 4
        %v1261 = vrot.slane %v1193, 5
        %v1262 = vsel %vm1230, %v1260, %v1261
        %v1263 = vrot.slane %v1261, 4
        %v1264 = vrot.slane %v1194, 5
        %v1265 = vsel %vm1230, %v1263, %v1264
        %v1266 = vrot.slane %v1195, 5
        %v1267 = vrot.slane %v1266, 4
        %v1268 = vrot.slane %v1196, 5
        %v1269 = vsel %vm1230, %v1267, %v1268
        %v1270 = vrot.slane %v1268, 4
        %v1271 = vrot.slane %v1197, 5
        %v1272 = vsel %vm1230, %v1270, %v1271
        %v1273 = vrot.slane %v1198, 5
        %v1274 = vrot.slane %v1273, 4
        %v1275 = vrot.slane %v1199, 5
        %v1276 = vsel %vm1230, %v1274, %v1275
        %v1277 = vrot.slane %v1275, 4
        %v1278 = vrot.slane %v1200, 5
        %v1279 = vsel %vm1230, %v1277, %v1278
        %v1280 = vrot.slane %v1201, 5
        %v1281 = vrot.slane %v1280, 4
        %v1282 = vrot.slane %v1202, 5
        %v1283 = vsel %vm1230, %v1281, %v1282
        %v1284 = vrot.slane %v1282, 4
        %v1285 = vrot.slane %v1203, 5
        %v1286 = vsel %vm1230, %v1284, %v1285
        %v1287 = vunpack.c.l.b16 %v1234
        %v1288 = vunpack.c.l.b16 %v1237
        %v1289 = vunpack.c.l.b16 %v1241
        %v1290 = vunpack.c.l.b16 %v1244
        %v1291 = vunpack.c.l.b16 %v1248
        %v1292 = vunpack.c.l.b16 %v1251
        %v1293 = vunpack.c.l.b16 %v1255
        %v1294 = vunpack.c.l.b16 %v1258
        %v1295 = vunpack.c.l.b16 %v1262
        %v1296 = vunpack.c.l.b16 %v1265
        %v1297 = vunpack.c.l.b16 %v1269
        %v1298 = vunpack.c.l.b16 %v1272
        %v1299 = vunpack.c.l.b16 %v1276
        %v1300 = vunpack.c.l.b16 %v1279
        %v1301 = vunpack.c.l.b16 %v1283
        %v1302 = vunpack.c.l.b16 %v1286
        %v1303 = vpack.c.b16 %v1288, %v1287
        %v1304 = vpack.c.b16 %v1290, %v1289
        %v1305 = vpack.c.b16 %v1292, %v1291
        %v1306 = vpack.c.b16 %v1294, %v1293
        %v1307 = vpack.c.b16 %v1296, %v1295
        %v1308 = vpack.c.b16 %v1298, %v1297
        %v1309 = vpack.c.b16 %v1300, %v1299
        %v1310 = vpack.c.b16 %v1302, %v1301
        %1311 = vrot.lane.b32.xlu0 %v1303, 16
        %v1312 = vpop.permute.xlu0 %1311
        %1313 = vrot.lane.b32.xlu0 %v1304, 16
        %v1314 = vpop.permute.xlu0 %1313
        %1315 = vrot.lane.b32.xlu0 %v1305, 16
        %v1316 = vpop.permute.xlu0 %1315
        %1317 = vrot.lane.b32.xlu0 %v1306, 16
        %v1318 = vpop.permute.xlu0 %1317
        %1319 = vrot.lane.b32.xlu0 %v1307, 16
        %v1320 = vpop.permute.xlu0 %1319
        %1321 = vrot.lane.b32.xlu0 %v1308, 16
        %v1322 = vpop.permute.xlu0 %1321
        %1323 = vrot.lane.b32.xlu0 %v1309, 16
        %v1324 = vpop.permute.xlu0 %1323
        %1325 = vrot.lane.b32.xlu0 %v1310, 16
        %v1326 = vpop.permute.xlu0 %1325
        %vm1335 = vcmask 195712
        %1336 = vst.msk [vmem:[#allocation3] sm:$0xff] %vm1335, %v1312
        %1337 = vst.msk [vmem:[#allocation3 + $0x8] sm:$0xff] %vm1335, %v1314
        %1338 = vst.msk [vmem:[#allocation3 + $0x10] sm:$0xff] %vm1335, %v1316
        %1339 = vst.msk [vmem:[#allocation3 + $0x18] sm:$0xff] %vm1335, %v1318
        %1340 = vst.msk [vmem:[#allocation3 + $0x20] sm:$0xff] %vm1335, %v1320
        %1341 = vst.msk [vmem:[#allocation3 + $0x28] sm:$0xff] %vm1335, %v1322
        %1342 = vst.msk [vmem:[#allocation3 + $0x30] sm:$0xff] %vm1335, %v1324
        %1343 = vst.msk [vmem:[#allocation3 + $0x38] sm:$0xff] %vm1335, %v1326
        %v1344 = vld [vmem:[#allocation3] sm:$0xff]
        %v1345 = vld [vmem:[#allocation3 + $0x8] sm:$0xff]
        %v1346 = vld [vmem:[#allocation3 + $0x10] sm:$0xff]
        %v1347 = vld [vmem:[#allocation3 + $0x18] sm:$0xff]
        %v1348 = vld [vmem:[#allocation3 + $0x20] sm:$0xff]
        %v1349 = vld [vmem:[#allocation3 + $0x28] sm:$0xff]
        %v1350 = vld [vmem:[#allocation3 + $0x30] sm:$0xff]
        %v1351 = vld [vmem:[#allocation3 + $0x38] sm:$0xff]
        %v1352 = vld [vmem:[%s5] sm:$0xf]
        %v1353 = vld [vmem:[%s5 + $0x4] sm:$0xf]
        %v1354 = vld [vmem:[%s5 + $0x8] sm:$0xf]
        %v1355 = vld [vmem:[%s690] sm:$0xf]
        %v1356 = vld [vmem:[%s690 + $0x4] sm:$0xf]
        %v1357 = vld [vmem:[%s690 + $0xc] sm:$0xf]
        %v1358 = vld [vmem:[%s690 + $0x10] sm:$0xf]
        %v1359 = vld [vmem:[%s690 + $0x18] sm:$0xf]
        %v1360 = vld [vmem:[%s690 + $0x1c] sm:$0xf]
        %v1361 = vld [vmem:[%s690 + $0x24] sm:$0xf]
        %v1362 = vld [vmem:[%s690 + $0x28] sm:$0xf]
        %v1363 = vld [vmem:[%s690 + $0x30] sm:$0xf]
        %v1364 = vld [vmem:[%s690 + $0x34] sm:$0xf]
        %v1365 = vld [vmem:[%s690 + $0x3c] sm:$0xf]
        %v1366 = vld [vmem:[%s690 + $0x40] sm:$0xf]
        %v1367 = vld [vmem:[%s690 + $0x48] sm:$0xf]
        %v1368 = vld [vmem:[%s690 + $0x4c] sm:$0xf]
        %v1369 = vld [vmem:[%s690 + $0x54] sm:$0xf]
        %v1370 = vld [vmem:[%s690 + $0x58] sm:$0xf]
        %v1387 = vunpack.c.l.b16 %v1355
        %v1388 = vunpack.c.l.b16 %v1356
        %v1389 = vunpack.c.l.b16 %v1357
        %v1390 = vunpack.c.l.b16 %v1358
        %v1391 = vunpack.c.l.b16 %v1359
        %v1392 = vunpack.c.l.b16 %v1360
        %v1393 = vunpack.c.l.b16 %v1361
        %v1394 = vunpack.c.l.b16 %v1362
        %v1395 = vunpack.c.l.b16 %v1363
        %v1396 = vunpack.c.l.b16 %v1364
        %v1397 = vunpack.c.l.b16 %v1365
        %v1398 = vunpack.c.l.b16 %v1366
        %v1399 = vunpack.c.l.b16 %v1367
        %v1400 = vunpack.c.l.b16 %v1368
        %v1401 = vunpack.c.l.b16 %v1369
        %v1402 = vunpack.c.l.b16 %v1370
        %v1403 = vpack.c.b16 %v1388, %v1387
        %v1404 = vpack.c.b16 %v1390, %v1389
        %v1405 = vpack.c.b16 %v1392, %v1391
        %v1406 = vpack.c.b16 %v1394, %v1393
        %v1407 = vpack.c.b16 %v1396, %v1395
        %v1408 = vpack.c.b16 %v1398, %v1397
        %v1409 = vpack.c.b16 %v1400, %v1399
        %v1410 = vpack.c.b16 %v1402, %v1401
        %1419 = vst.msk [vmem:[#allocation3] sm:$0xff] %vm895, %v1403
        %1420 = vst.msk [vmem:[#allocation3 + $0x8] sm:$0xff] %vm895, %v1404
        %1421 = vst.msk [vmem:[#allocation3 + $0x10] sm:$0xff] %vm895, %v1405
        %1422 = vst.msk [vmem:[#allocation3 + $0x18] sm:$0xff] %vm895, %v1406
        %1423 = vst.msk [vmem:[#allocation3 + $0x20] sm:$0xff] %vm895, %v1407
        %1424 = vst.msk [vmem:[#allocation3 + $0x28] sm:$0xff] %vm895, %v1408
        %1425 = vst.msk [vmem:[#allocation3 + $0x30] sm:$0xff] %vm895, %v1409
        %1426 = vst.msk [vmem:[#allocation3 + $0x38] sm:$0xff] %vm895, %v1410
        %v1427 = vld [vmem:[%s690] sm:$0xf]
        %v1428 = vld [vmem:[%s690 + $0x4] sm:$0xf]
        %v1429 = vld [vmem:[%s690 + $0x8] sm:$0x1]
        %v1430 = vld [vmem:[%s690 + $0xc] sm:$0xf]
        %v1431 = vld [vmem:[%s690 + $0x10] sm:$0xf]
        %v1432 = vld [vmem:[%s690 + $0x14] sm:$0x1]
        %v1433 = vld [vmem:[%s690 + $0x18] sm:$0xf]
        %v1434 = vld [vmem:[%s690 + $0x1c] sm:$0xf]
        %v1435 = vld [vmem:[%s690 + $0x20] sm:$0x1]
        %v1436 = vld [vmem:[%s690 + $0x24] sm:$0xf]
        %v1437 = vld [vmem:[%s690 + $0x28] sm:$0xf]
        %v1438 = vld [vmem:[%s690 + $0x2c] sm:$0x1]
        %v1439 = vld [vmem:[%s690 + $0x30] sm:$0xf]
        %v1440 = vld [vmem:[%s690 + $0x34] sm:$0xf]
        %v1441 = vld [vmem:[%s690 + $0x38] sm:$0x1]
        %v1442 = vld [vmem:[%s690 + $0x3c] sm:$0xf]
        %v1443 = vld [vmem:[%s690 + $0x40] sm:$0xf]
        %v1444 = vld [vmem:[%s690 + $0x44] sm:$0x1]
        %v1445 = vld [vmem:[%s690 + $0x48] sm:$0xf]
        %v1446 = vld [vmem:[%s690 + $0x4c] sm:$0xf]
        %v1447 = vld [vmem:[%s690 + $0x50] sm:$0x1]
        %v1448 = vld [vmem:[%s690 + $0x54] sm:$0xf]
        %v1449 = vld [vmem:[%s690 + $0x58] sm:$0xf]
        %v1450 = vld [vmem:[%s690 + $0x5c] sm:$0x1]
        %v1452 = vshrl.u32 %v1427, 16
        %v1454 = vrot.slane %v1452, 4
        %v1455 = vshll.u32 %v1427, 16
        %v1457 = vrot.slane %v1455, 5
        %v1458 = vor.u32 %v1454, %v1457
        %v1459 = vrot.slane %v1458, 4
        %v1461 = vshll.u32 %v1428, 16
        %v1463 = vrot.slane %v1461, 5
        %v1464 = vsel %vm930, %v1459, %v1463
        %v1465 = vshrl.u32 %v1428, 16
        %v1467 = vrot.slane %v1465, 4
        %v1468 = vor.u32 %v1467, %v1463
        %v1469 = vrot.slane %v1468, 4
        %v1471 = vshll.u32 %v1429, 16
        %v1473 = vrot.slane %v1471, 5
        %v1474 = vsel %vm930, %v1469, %v1473
        %v1476 = vshrl.u32 %v1430, 16
        %v1478 = vrot.slane %v1476, 4
        %v1479 = vshll.u32 %v1430, 16
        %v1481 = vrot.slane %v1479, 5
        %v1482 = vor.u32 %v1478, %v1481
        %v1483 = vrot.slane %v1482, 4
        %v1485 = vshll.u32 %v1431, 16
        %v1487 = vrot.slane %v1485, 5
        %v1488 = vsel %vm930, %v1483, %v1487
        %v1489 = vshrl.u32 %v1431, 16
        %v1491 = vrot.slane %v1489, 4
        %v1492 = vor.u32 %v1491, %v1487
        %v1493 = vrot.slane %v1492, 4
        %v1495 = vshll.u32 %v1432, 16
        %v1497 = vrot.slane %v1495, 5
        %v1498 = vsel %vm930, %v1493, %v1497
        %v1500 = vshrl.u32 %v1433, 16
        %v1502 = vrot.slane %v1500, 4
        %v1503 = vshll.u32 %v1433, 16
        %v1505 = vrot.slane %v1503, 5
        %v1506 = vor.u32 %v1502, %v1505
        %v1507 = vrot.slane %v1506, 4
        %v1509 = vshll.u32 %v1434, 16
        %v1511 = vrot.slane %v1509, 5
        %v1512 = vsel %vm930, %v1507, %v1511
        %v1513 = vshrl.u32 %v1434, 16
        %v1515 = vrot.slane %v1513, 4
        %v1516 = vor.u32 %v1515, %v1511
        %v1517 = vrot.slane %v1516, 4
        %v1519 = vshll.u32 %v1435, 16
        %v1521 = vrot.slane %v1519, 5
        %v1522 = vsel %vm930, %v1517, %v1521
        %v1524 = vshrl.u32 %v1436, 16
        %v1526 = vrot.slane %v1524, 4
        %v1527 = vshll.u32 %v1436, 16
        %v1529 = vrot.slane %v1527, 5
        %v1530 = vor.u32 %v1526, %v1529
        %v1531 = vrot.slane %v1530, 4
        %v1533 = vshll.u32 %v1437, 16
        %v1535 = vrot.slane %v1533, 5
        %v1536 = vsel %vm930, %v1531, %v1535
        %v1537 = vshrl.u32 %v1437, 16
        %v1539 = vrot.slane %v1537, 4
        %v1540 = vor.u32 %v1539, %v1535
        %v1541 = vrot.slane %v1540, 4
        %v1543 = vshll.u32 %v1438, 16
        %v1545 = vrot.slane %v1543, 5
        %v1546 = vsel %vm930, %v1541, %v1545
        %v1548 = vshrl.u32 %v1439, 16
        %v1550 = vrot.slane %v1548, 4
        %v1551 = vshll.u32 %v1439, 16
        %v1553 = vrot.slane %v1551, 5
        %v1554 = vor.u32 %v1550, %v1553
        %v1555 = vrot.slane %v1554, 4
        %v1557 = vshll.u32 %v1440, 16
        %v1559 = vrot.slane %v1557, 5
        %v1560 = vsel %vm930, %v1555, %v1559
        %v1561 = vshrl.u32 %v1440, 16
        %v1563 = vrot.slane %v1561, 4
        %v1564 = vor.u32 %v1563, %v1559
        %v1565 = vrot.slane %v1564, 4
        %v1567 = vshll.u32 %v1441, 16
        %v1569 = vrot.slane %v1567, 5
        %v1570 = vsel %vm930, %v1565, %v1569
        %v1572 = vshrl.u32 %v1442, 16
        %v1574 = vrot.slane %v1572, 4
        %v1575 = vshll.u32 %v1442, 16
        %v1577 = vrot.slane %v1575, 5
        %v1578 = vor.u32 %v1574, %v1577
        %v1579 = vrot.slane %v1578, 4
        %v1581 = vshll.u32 %v1443, 16
        %v1583 = vrot.slane %v1581, 5
        %v1584 = vsel %vm930, %v1579, %v1583
        %v1585 = vshrl.u32 %v1443, 16
        %v1587 = vrot.slane %v1585, 4
        %v1588 = vor.u32 %v1587, %v1583
        %v1589 = vrot.slane %v1588, 4
        %v1591 = vshll.u32 %v1444, 16
        %v1593 = vrot.slane %v1591, 5
        %v1594 = vsel %vm930, %v1589, %v1593
        %v1596 = vshrl.u32 %v1445, 16
        %v1598 = vrot.slane %v1596, 4
        %v1599 = vshll.u32 %v1445, 16
        %v1601 = vrot.slane %v1599, 5
        %v1602 = vor.u32 %v1598, %v1601
        %v1603 = vrot.slane %v1602, 4
        %v1605 = vshll.u32 %v1446, 16
        %v1607 = vrot.slane %v1605, 5
        %v1608 = vsel %vm930, %v1603, %v1607
        %v1609 = vshrl.u32 %v1446, 16
        %v1611 = vrot.slane %v1609, 4
        %v1612 = vor.u32 %v1611, %v1607
        %v1613 = vrot.slane %v1612, 4
        %v1615 = vshll.u32 %v1447, 16
        %v1617 = vrot.slane %v1615, 5
        %v1618 = vsel %vm930, %v1613, %v1617
        %v1620 = vshrl.u32 %v1448, 16
        %v1622 = vrot.slane %v1620, 4
        %v1623 = vshll.u32 %v1448, 16
        %v1625 = vrot.slane %v1623, 5
        %v1626 = vor.u32 %v1622, %v1625
        %v1627 = vrot.slane %v1626, 4
        %v1629 = vshll.u32 %v1449, 16
        %v1631 = vrot.slane %v1629, 5
        %v1632 = vsel %vm930, %v1627, %v1631
        %v1633 = vshrl.u32 %v1449, 16
        %v1635 = vrot.slane %v1633, 4
        %v1636 = vor.u32 %v1635, %v1631
        %v1637 = vrot.slane %v1636, 4
        %v1639 = vshll.u32 %v1450, 16
        %v1641 = vrot.slane %v1639, 5
        %v1642 = vsel %vm930, %v1637, %v1641
        %v1643 = vunpack.c.l.b16 %v1464
        %v1644 = vunpack.c.l.b16 %v1474
        %v1645 = vunpack.c.l.b16 %v1488
        %v1646 = vunpack.c.l.b16 %v1498
        %v1647 = vunpack.c.l.b16 %v1512
        %v1648 = vunpack.c.l.b16 %v1522
        %v1649 = vunpack.c.l.b16 %v1536
        %v1650 = vunpack.c.l.b16 %v1546
        %v1651 = vunpack.c.l.b16 %v1560
        %v1652 = vunpack.c.l.b16 %v1570
        %v1653 = vunpack.c.l.b16 %v1584
        %v1654 = vunpack.c.l.b16 %v1594
        %v1655 = vunpack.c.l.b16 %v1608
        %v1656 = vunpack.c.l.b16 %v1618
        %v1657 = vunpack.c.l.b16 %v1632
        %v1658 = vunpack.c.l.b16 %v1642
        %v1659 = vpack.c.b16 %v1644, %v1643
        %v1660 = vpack.c.b16 %v1646, %v1645
        %v1661 = vpack.c.b16 %v1648, %v1647
        %v1662 = vpack.c.b16 %v1650, %v1649
        %v1663 = vpack.c.b16 %v1652, %v1651
        %v1664 = vpack.c.b16 %v1654, %v1653
        %v1665 = vpack.c.b16 %v1656, %v1655
        %v1666 = vpack.c.b16 %v1658, %v1657
        %1667 = vrot.lane.b32.xlu0 %v1659, 8
        %v1668 = vpop.permute.xlu0 %1667
        %1669 = vrot.lane.b32.xlu0 %v1660, 8
        %v1670 = vpop.permute.xlu0 %1669
        %1671 = vrot.lane.b32.xlu0 %v1661, 8
        %v1672 = vpop.permute.xlu0 %1671
        %1673 = vrot.lane.b32.xlu0 %v1662, 8
        %v1674 = vpop.permute.xlu0 %1673
        %1675 = vrot.lane.b32.xlu0 %v1663, 8
        %v1676 = vpop.permute.xlu0 %1675
        %1677 = vrot.lane.b32.xlu0 %v1664, 8
        %v1678 = vpop.permute.xlu0 %1677
        %1679 = vrot.lane.b32.xlu0 %v1665, 8
        %v1680 = vpop.permute.xlu0 %1679
        %1681 = vrot.lane.b32.xlu0 %v1666, 8
        %v1682 = vpop.permute.xlu0 %1681
        %1691 = vst.msk [vmem:[#allocation3] sm:$0xff] %vm1171, %v1668
        %1692 = vst.msk [vmem:[#allocation3 + $0x8] sm:$0xff] %vm1171, %v1670
        %1693 = vst.msk [vmem:[#allocation3 + $0x10] sm:$0xff] %vm1171, %v1672
        %1694 = vst.msk [vmem:[#allocation3 + $0x18] sm:$0xff] %vm1171, %v1674
        %1695 = vst.msk [vmem:[#allocation3 + $0x20] sm:$0xff] %vm1171, %v1676
        %1696 = vst.msk [vmem:[#allocation3 + $0x28] sm:$0xff] %vm1171, %v1678
        %1697 = vst.msk [vmem:[#allocation3 + $0x30] sm:$0xff] %vm1171, %v1680
        %1698 = vst.msk [vmem:[#allocation3 + $0x38] sm:$0xff] %vm1171, %v1682
        %v1699 = vld [vmem:[%s690] sm:$0xe]
        %v1700 = vld [vmem:[%s690 + $0x4] sm:$0xf]
        %v1701 = vld [vmem:[%s690 + $0x8] sm:$0x1]
        %v1702 = vld [vmem:[%s690 + $0xc] sm:$0xe]
        %v1703 = vld [vmem:[%s690 + $0x10] sm:$0xf]
        %v1704 = vld [vmem:[%s690 + $0x14] sm:$0x1]
        %v1705 = vld [vmem:[%s690 + $0x18] sm:$0xe]
        %v1706 = vld [vmem:[%s690 + $0x1c] sm:$0xf]
        %v1707 = vld [vmem:[%s690 + $0x20] sm:$0x1]
        %v1708 = vld [vmem:[%s690 + $0x24] sm:$0xe]
        %v1709 = vld [vmem:[%s690 + $0x28] sm:$0xf]
        %v1710 = vld [vmem:[%s690 + $0x2c] sm:$0x1]
        %v1711 = vld [vmem:[%s690 + $0x30] sm:$0xe]
        %v1712 = vld [vmem:[%s690 + $0x34] sm:$0xf]
        %v1713 = vld [vmem:[%s690 + $0x38] sm:$0x1]
        %v1714 = vld [vmem:[%s690 + $0x3c] sm:$0xe]
        %v1715 = vld [vmem:[%s690 + $0x40] sm:$0xf]
        %v1716 = vld [vmem:[%s690 + $0x44] sm:$0x1]
        %v1717 = vld [vmem:[%s690 + $0x48] sm:$0xe]
        %v1718 = vld [vmem:[%s690 + $0x4c] sm:$0xf]
        %v1719 = vld [vmem:[%s690 + $0x50] sm:$0x1]
        %v1720 = vld [vmem:[%s690 + $0x54] sm:$0xe]
        %v1721 = vld [vmem:[%s690 + $0x58] sm:$0xf]
        %v1722 = vld [vmem:[%s690 + $0x5c] sm:$0x1]
        %v1747 = vrot.slane %v1699, 5
        %v1748 = vrot.slane %v1747, 4
        %v1749 = vrot.slane %v1700, 5
        %v1750 = vsel %vm1230, %v1748, %v1749
        %v1751 = vrot.slane %v1749, 4
        %v1752 = vrot.slane %v1701, 5
        %v1753 = vsel %vm1230, %v1751, %v1752
        %v1754 = vrot.slane %v1702, 5
        %v1755 = vrot.slane %v1754, 4
        %v1756 = vrot.slane %v1703, 5
        %v1757 = vsel %vm1230, %v1755, %v1756
        %v1758 = vrot.slane %v1756, 4
        %v1759 = vrot.slane %v1704, 5
        %v1760 = vsel %vm1230, %v1758, %v1759
        %v1761 = vrot.slane %v1705, 5
        %v1762 = vrot.slane %v1761, 4
        %v1763 = vrot.slane %v1706, 5
        %v1764 = vsel %vm1230, %v1762, %v1763
        %v1765 = vrot.slane %v1763, 4
        %v1766 = vrot.slane %v1707, 5
        %v1767 = vsel %vm1230, %v1765, %v1766
        %v1768 = vrot.slane %v1708, 5
        %v1769 = vrot.slane %v1768, 4
        %v1770 = vrot.slane %v1709, 5
        %v1771 = vsel %vm1230, %v1769, %v1770
        %v1772 = vrot.slane %v1770, 4
        %v1773 = vrot.slane %v1710, 5
        %v1774 = vsel %vm1230, %v1772, %v1773
        %v1775 = vrot.slane %v1711, 5
        %v1776 = vrot.slane %v1775, 4
        %v1777 = vrot.slane %v1712, 5
        %v1778 = vsel %vm1230, %v1776, %v1777
        %v1779 = vrot.slane %v1777, 4
        %v1780 = vrot.slane %v1713, 5
        %v1781 = vsel %vm1230, %v1779, %v1780
        %v1782 = vrot.slane %v1714, 5
        %v1783 = vrot.slane %v1782, 4
        %v1784 = vrot.slane %v1715, 5
        %v1785 = vsel %vm1230, %v1783, %v1784
        %v1786 = vrot.slane %v1784, 4
        %v1787 = vrot.slane %v1716, 5
        %v1788 = vsel %vm1230, %v1786, %v1787
        %v1789 = vrot.slane %v1717, 5
        %v1790 = vrot.slane %v1789, 4
        %v1791 = vrot.slane %v1718, 5
        %v1792 = vsel %vm1230, %v1790, %v1791
        %v1793 = vrot.slane %v1791, 4
        %v1794 = vrot.slane %v1719, 5
        %v1795 = vsel %vm1230, %v1793, %v1794
        %v1796 = vrot.slane %v1720, 5
        %v1797 = vrot.slane %v1796, 4
        %v1798 = vrot.slane %v1721, 5
        %v1799 = vsel %vm1230, %v1797, %v1798
        %v1800 = vrot.slane %v1798, 4
        %v1801 = vrot.slane %v1722, 5
        %v1802 = vsel %vm1230, %v1800, %v1801
        %v1803 = vunpack.c.l.b16 %v1750
        %v1804 = vunpack.c.l.b16 %v1753
        %v1805 = vunpack.c.l.b16 %v1757
        %v1806 = vunpack.c.l.b16 %v1760
        %v1807 = vunpack.c.l.b16 %v1764
        %v1808 = vunpack.c.l.b16 %v1767
        %v1809 = vunpack.c.l.b16 %v1771
        %v1810 = vunpack.c.l.b16 %v1774
        %v1811 = vunpack.c.l.b16 %v1778
        %v1812 = vunpack.c.l.b16 %v1781
        %v1813 = vunpack.c.l.b16 %v1785
        %v1814 = vunpack.c.l.b16 %v1788
        %v1815 = vunpack.c.l.b16 %v1792
        %v1816 = vunpack.c.l.b16 %v1795
        %v1817 = vunpack.c.l.b16 %v1799
        %v1818 = vunpack.c.l.b16 %v1802
        %v1819 = vpack.c.b16 %v1804, %v1803
        %v1820 = vpack.c.b16 %v1806, %v1805
        %v1821 = vpack.c.b16 %v1808, %v1807
        %v1822 = vpack.c.b16 %v1810, %v1809
        %v1823 = vpack.c.b16 %v1812, %v1811
        %v1824 = vpack.c.b16 %v1814, %v1813
        %v1825 = vpack.c.b16 %v1816, %v1815
        %v1826 = vpack.c.b16 %v1818, %v1817
        %1827 = vrot.lane.b32.xlu0 %v1819, 16
        %v1828 = vpop.permute.xlu0 %1827
        %1829 = vrot.lane.b32.xlu0 %v1820, 16
        %v1830 = vpop.permute.xlu0 %1829
        %1831 = vrot.lane.b32.xlu0 %v1821, 16
        %v1832 = vpop.permute.xlu0 %1831
        %1833 = vrot.lane.b32.xlu0 %v1822, 16
        %v1834 = vpop.permute.xlu0 %1833
        %1835 = vrot.lane.b32.xlu0 %v1823, 16
        %v1836 = vpop.permute.xlu0 %1835
        %1837 = vrot.lane.b32.xlu0 %v1824, 16
        %v1838 = vpop.permute.xlu0 %1837
        %1839 = vrot.lane.b32.xlu0 %v1825, 16
        %v1840 = vpop.permute.xlu0 %1839
        %1841 = vrot.lane.b32.xlu0 %v1826, 16
        %v1842 = vpop.permute.xlu0 %1841
        %1851 = vst.msk [vmem:[#allocation3] sm:$0xff] %vm1335, %v1828
        %1852 = vst.msk [vmem:[#allocation3 + $0x8] sm:$0xff] %vm1335, %v1830
        %1853 = vst.msk [vmem:[#allocation3 + $0x10] sm:$0xff] %vm1335, %v1832
        %1854 = vst.msk [vmem:[#allocation3 + $0x18] sm:$0xff] %vm1335, %v1834
        %1855 = vst.msk [vmem:[#allocation3 + $0x20] sm:$0xff] %vm1335, %v1836
        %1856 = vst.msk [vmem:[#allocation3 + $0x28] sm:$0xff] %vm1335, %v1838
        %1857 = vst.msk [vmem:[#allocation3 + $0x30] sm:$0xff] %vm1335, %v1840
        %1858 = vst.msk [vmem:[#allocation3 + $0x38] sm:$0xff] %vm1335, %v1842
        %v1859 = vld [vmem:[#allocation3] sm:$0xff]
        %v1860 = vld [vmem:[#allocation3 + $0x8] sm:$0xff]
        %v1861 = vld [vmem:[#allocation3 + $0x10] sm:$0xff]
        %v1862 = vld [vmem:[#allocation3 + $0x18] sm:$0xff]
        %v1863 = vld [vmem:[#allocation3 + $0x20] sm:$0xff]
        %v1864 = vld [vmem:[#allocation3 + $0x28] sm:$0xff]
        %v1865 = vld [vmem:[#allocation3 + $0x30] sm:$0xff]
        %v1866 = vld [vmem:[#allocation3 + $0x38] sm:$0xff]
        %s1867 = scalar_lea.vmem %s5, 12
        %v1868 = vld [vmem:[%s1867] sm:$0xf]
        %v1869 = vld [vmem:[%s1867 + $0x4] sm:$0xf]
        %v1870 = vld [vmem:[%s1867 + $0x8] sm:$0xf]
        %v1874 = vunpack.c.l.b16 %v1868
        %v1875 = vunpack.c.l.b16 %v1869
        %v1876 = vunpack.c.l.b16 %v1870
        %v1877 = vpack.c.b16 %v1875, %v1874
        %v1878 = vpack.c.b16 %v1876, %v1876
        %vm1880 = vcmask 195584
        %v1882 = vsel %vm1880, %v1859, 0
        %v1885 = vsel %vm1880, %v1860, 0
        %v1888 = vsel %vm1880, %v1861, 0
        %v1891 = vsel %vm1880, %v1862, 0
        %v1894 = vsel %vm1880, %v1863, 0
        %v1897 = vsel %vm1880, %v1864, 0
        %v1900 = vsel %vm1880, %v1865, 0
        %v1903 = vsel %vm1880, %v1866, 0
        %vm1905 = vcmask 1043456
        %v1907 = vsel %vm1905, %v1878, 0
        %1909 = vmatprep.subr.bf16.mxu0 0
        %1910 = vmatpush1.bf16.msra.mxu0 %v1877
        %1911 = vmatprep.subr.bf16.mxu0 0
        %1912 = vmatpush1.bf16.msra.mxu0 %v1907
        %1913 = vmatprep.subr.bf16.mxu0 0
        %1914 = vmatpush1.bf16.msra.mxu0 0
        %1915 = vmatprep.subr.bf16.mxu0 0
        %1916 = vmatpush1.bf16.msra.mxu0 0
        %1917 = vmatprep.subr.bf16.mxu0 0
        %1918 = vmatpush1.bf16.msra.mxu0 0
        %1919 = vmatprep.subr.bf16.mxu0 0
        %1920 = vmatpush1.bf16.msra.mxu0 0
        %1921 = vmatprep.subr.bf16.mxu0 0
        %1922 = vmatpush1.bf16.msra.mxu0 0
        %1923 = vmatprep.subr.bf16.mxu0 0
        %1924 = vmatpush1.bf16.msra.mxu0 0
        %1925 = vmatprep.subr.bf16.mxu0 0
        %1926 = vmatpush1.bf16.msra.mxu0 0
        %1927 = vmatprep.subr.bf16.mxu0 0
        %1928 = vmatpush1.bf16.msra.mxu0 0
        %1929 = vmatprep.subr.bf16.mxu0 0
        %1930 = vmatpush1.bf16.msra.mxu0 0
        %1931 = vmatprep.subr.bf16.mxu0 0
        %1932 = vmatpush1.bf16.msra.mxu0 0
        %1933 = vmatprep.subr.bf16.mxu0 0
        %1934 = vmatpush1.bf16.msra.mxu0 0
        %1935 = vmatprep.subr.bf16.mxu0 0
        %1936 = vmatpush1.bf16.msra.mxu0 0
        %1937 = vmatprep.subr.bf16.mxu0 0
        %1938 = vmatpush1.bf16.msra.mxu0 0
        %1939 = vmatprep.subr.bf16.mxu0 0
        %1940 = vmatpush1.bf16.msra.mxu0 0
        %1941 = vmatprep.mubr.bf16.mxu0 0
        %1942 = vmatmul.mubr.bf16.gmra.mrb[0].mxu0 %v1882
        %v1943 = vpop.f32.mrb[0].mxu0
        %v1944 = vadd.f32 0.0, %v1943
        %v1945 = vpop.f32.mrb[0].mxu0
        %v1946 = vpop.f32.mrb[0].mxu0
        %v1947 = vadd.f32 0.0, %v1946
        %v1948 = vpop.f32.mrb[0].mxu0
        %1949 = vmatprep.mubr.bf16.mxu0 0
        %1950 = vmatmul.mubr.bf16.gmra.mrb[0].mxu0 %v1885
        %v1951 = vpop.f32.mrb[0].mxu0
        %v1952 = vadd.f32 0.0, %v1951
        %v1953 = vpop.f32.mrb[0].mxu0
        %v1954 = vpop.f32.mrb[0].mxu0
        %v1955 = vadd.f32 0.0, %v1954
        %v1956 = vpop.f32.mrb[0].mxu0
        %1957 = vmatprep.mubr.bf16.mxu0 0
        %1958 = vmatmul.mubr.bf16.gmra.mrb[0].mxu0 %v1888
        %v1959 = vpop.f32.mrb[0].mxu0
        %v1960 = vadd.f32 0.0, %v1959
        %v1961 = vpop.f32.mrb[0].mxu0
        %v1962 = vpop.f32.mrb[0].mxu0
        %v1963 = vadd.f32 0.0, %v1962
        %v1964 = vpop.f32.mrb[0].mxu0
        %1965 = vmatprep.mubr.bf16.mxu0 0
        %1966 = vmatmul.mubr.bf16.gmra.mrb[0].mxu0 %v1891
        %v1967 = vpop.f32.mrb[0].mxu0
        %v1968 = vadd.f32 0.0, %v1967
        %v1969 = vpop.f32.mrb[0].mxu0
        %v1970 = vpop.f32.mrb[0].mxu0
        %v1971 = vadd.f32 0.0, %v1970
        %v1972 = vpop.f32.mrb[0].mxu0
        %1973 = vmatprep.mubr.bf16.mxu0 0
        %1974 = vmatmul.mubr.bf16.gmra.mrb[0].mxu0 %v1894
        %v1975 = vpop.f32.mrb[0].mxu0
        %v1976 = vadd.f32 0.0, %v1975
        %v1977 = vpop.f32.mrb[0].mxu0
        %v1978 = vpop.f32.mrb[0].mxu0
        %v1979 = vadd.f32 0.0, %v1978
        %v1980 = vpop.f32.mrb[0].mxu0
        %1981 = vmatprep.mubr.bf16.mxu0 0
        %1982 = vmatmul.mubr.bf16.gmra.mrb[0].mxu0 %v1897
        %v1983 = vpop.f32.mrb[0].mxu0
        %v1984 = vadd.f32 0.0, %v1983
        %v1985 = vpop.f32.mrb[0].mxu0
        %v1986 = vpop.f32.mrb[0].mxu0
        %v1987 = vadd.f32 0.0, %v1986
        %v1988 = vpop.f32.mrb[0].mxu0
        %1989 = vmatprep.mubr.bf16.mxu0 0
        %1990 = vmatmul.mubr.bf16.gmra.mrb[0].mxu0 %v1900
        %v1991 = vpop.f32.mrb[0].mxu0
        %v1992 = vadd.f32 0.0, %v1991
        %v1993 = vpop.f32.mrb[0].mxu0
        %v1994 = vpop.f32.mrb[0].mxu0
        %v1995 = vadd.f32 0.0, %v1994
        %v1996 = vpop.f32.mrb[0].mxu0
        %1997 = vmatprep.mubr.bf16.mxu0 0
        %1998 = vmatmul.mubr.bf16.gmra.mrb[0].mxu0 %v1903
        %v1999 = vpop.f32.mrb[0].mxu0
        %v2000 = vadd.f32 0.0, %v1999
        %v2001 = vpop.f32.mrb[0].mxu0
        %v2002 = vpop.f32.mrb[0].mxu0
        %v2003 = vadd.f32 0.0, %v2002
        %v2004 = vpop.f32.mrb[0].mxu0
        %2005 = vdwg.mxu0
        %v2009 = vunpack.c.l.b16 %v1352
        %v2010 = vunpack.c.l.b16 %v1353
        %v2011 = vunpack.c.l.b16 %v1354
        %v2012 = vpack.c.b16 %v2010, %v2009
        %v2013 = vpack.c.b16 %v2011, %v2011
        %v2016 = vsel %vm1880, %v1344, 0
        %v2019 = vsel %vm1880, %v1345, 0
        %v2022 = vsel %vm1880, %v1346, 0
        %v2025 = vsel %vm1880, %v1347, 0
        %v2028 = vsel %vm1880, %v1348, 0
        %v2031 = vsel %vm1880, %v1349, 0
        %v2034 = vsel %vm1880, %v1350, 0
        %v2037 = vsel %vm1880, %v1351, 0
        %v2040 = vsel %vm1905, %v2013, 0
        %2042 = vmatprep.subr.bf16.mxu0 0
        %2043 = vmatpush1.bf16.msra.mxu0 %v2012
        %2044 = vmatprep.subr.bf16.mxu0 0
        %2045 = vmatpush1.bf16.msra.mxu0 %v2040
        %2046 = vmatprep.subr.bf16.mxu0 0
        %2047 = vmatpush1.bf16.msra.mxu0 0
        %2048 = vmatprep.subr.bf16.mxu0 0
        %2049 = vmatpush1.bf16.msra.mxu0 0
        %2050 = vmatprep.subr.bf16.mxu0 0
        %2051 = vmatpush1.bf16.msra.mxu0 0
        %2052 = vmatprep.subr.bf16.mxu0 0
        %2053 = vmatpush1.bf16.msra.mxu0 0
        %2054 = vmatprep.subr.bf16.mxu0 0
        %2055 = vmatpush1.bf16.msra.mxu0 0
        %2056 = vmatprep.subr.bf16.mxu0 0
        %2057 = vmatpush1.bf16.msra.mxu0 0
        %2058 = vmatprep.subr.bf16.mxu0 0
        %2059 = vmatpush1.bf16.msra.mxu0 0
        %2060 = vmatprep.subr.bf16.mxu0 0
        %2061 = vmatpush1.bf16.msra.mxu0 0
        %2062 = vmatprep.subr.bf16.mxu0 0
        %2063 = vmatpush1.bf16.msra.mxu0 0
        %2064 = vmatprep.subr.bf16.mxu0 0
        %2065 = vmatpush1.bf16.msra.mxu0 0
        %2066 = vmatprep.subr.bf16.mxu0 0
        %2067 = vmatpush1.bf16.msra.mxu0 0
        %2068 = vmatprep.subr.bf16.mxu0 0
        %2069 = vmatpush1.bf16.msra.mxu0 0
        %2070 = vmatprep.subr.bf16.mxu0 0
        %2071 = vmatpush1.bf16.msra.mxu0 0
        %2072 = vmatprep.subr.bf16.mxu0 0
        %2073 = vmatpush1.bf16.msra.mxu0 0
        %2074 = vmatprep.mubr.bf16.mxu0 0
        %2075 = vmatmul.mubr.bf16.gmra.mrb[0].mxu0 %v2016
        %v2076 = vpop.f32.mrb[0].mxu0
        %v2077 = vadd.f32 %v1944, %v2076
        %v2078 = vpop.f32.mrb[0].mxu0
        %v2079 = vpop.f32.mrb[0].mxu0
        %v2080 = vadd.f32 %v1947, %v2079
        %v2081 = vpop.f32.mrb[0].mxu0
        %2082 = vmatprep.mubr.bf16.mxu0 0
        %2083 = vmatmul.mubr.bf16.gmra.mrb[0].mxu0 %v2019
        %v2084 = vpop.f32.mrb[0].mxu0
        %v2085 = vadd.f32 %v1952, %v2084
        %v2086 = vpop.f32.mrb[0].mxu0
        %v2087 = vpop.f32.mrb[0].mxu0
        %v2088 = vadd.f32 %v1955, %v2087
        %v2089 = vpop.f32.mrb[0].mxu0
        %2090 = vmatprep.mubr.bf16.mxu0 0
        %2091 = vmatmul.mubr.bf16.gmra.mrb[0].mxu0 %v2022
        %v2092 = vpop.f32.mrb[0].mxu0
        %v2093 = vadd.f32 %v1960, %v2092
        %v2094 = vpop.f32.mrb[0].mxu0
        %v2095 = vpop.f32.mrb[0].mxu0
        %v2096 = vadd.f32 %v1963, %v2095
        %v2097 = vpop.f32.mrb[0].mxu0
        %2098 = vmatprep.mubr.bf16.mxu0 0
        %2099 = vmatmul.mubr.bf16.gmra.mrb[0].mxu0 %v2025
        %v2100 = vpop.f32.mrb[0].mxu0
        %v2101 = vadd.f32 %v1968, %v2100
        %v2102 = vpop.f32.mrb[0].mxu0
        %v2103 = vpop.f32.mrb[0].mxu0
        %v2104 = vadd.f32 %v1971, %v2103
        %v2105 = vpop.f32.mrb[0].mxu0
        %2106 = vmatprep.mubr.bf16.mxu0 0
        %2107 = vmatmul.mubr.bf16.gmra.mrb[0].mxu0 %v2028
        %v2108 = vpop.f32.mrb[0].mxu0
        %v2109 = vadd.f32 %v1976, %v2108
        %v2110 = vpop.f32.mrb[0].mxu0
        %v2111 = vpop.f32.mrb[0].mxu0
        %v2112 = vadd.f32 %v1979, %v2111
        %v2113 = vpop.f32.mrb[0].mxu0
        %2114 = vmatprep.mubr.bf16.mxu0 0
        %2115 = vmatmul.mubr.bf16.gmra.mrb[0].mxu0 %v2031
        %v2116 = vpop.f32.mrb[0].mxu0
        %v2117 = vadd.f32 %v1984, %v2116
        %v2118 = vpop.f32.mrb[0].mxu0
        %v2119 = vpop.f32.mrb[0].mxu0
        %v2120 = vadd.f32 %v1987, %v2119
        %v2121 = vpop.f32.mrb[0].mxu0
        %2122 = vmatprep.mubr.bf16.mxu0 0
        %2123 = vmatmul.mubr.bf16.gmra.mrb[0].mxu0 %v2034
        %v2124 = vpop.f32.mrb[0].mxu0
        %v2125 = vadd.f32 %v1992, %v2124
        %v2126 = vpop.f32.mrb[0].mxu0
        %v2127 = vpop.f32.mrb[0].mxu0
        %v2128 = vadd.f32 %v1995, %v2127
        %v2129 = vpop.f32.mrb[0].mxu0
        %2130 = vmatprep.mubr.bf16.mxu0 0
        %2131 = vmatmul.mubr.bf16.gmra.mrb[0].mxu0 %v2037
        %v2132 = vpop.f32.mrb[0].mxu0
        %v2133 = vadd.f32 %v2000, %v2132
        %v2134 = vpop.f32.mrb[0].mxu0
        %v2135 = vpop.f32.mrb[0].mxu0
        %v2136 = vadd.f32 %v2003, %v2135
        %v2137 = vpop.f32.mrb[0].mxu0
        %2138 = vdwg.mxu0
        %s2139 = scalar_lea.vmem [#allocation2], 24
        %v2140 = vld [vmem:[%s2139] sm:$0xf]
        %v2141 = vld [vmem:[%s2139 + $0x4] sm:$0xf]
        %v2142 = vld [vmem:[%s2139 + $0xc] sm:$0xf]
        %v2143 = vld [vmem:[%s2139 + $0x10] sm:$0xf]
        %v2144 = vld [vmem:[%s2139 + $0x18] sm:$0xf]
        %v2145 = vld [vmem:[%s2139 + $0x1c] sm:$0xf]
        %v2146 = vld [vmem:[%s2139 + $0x24] sm:$0xf]
        %v2147 = vld [vmem:[%s2139 + $0x28] sm:$0xf]
        %v2148 = vld [vmem:[%s2139 + $0x30] sm:$0xf]
        %v2149 = vld [vmem:[%s2139 + $0x34] sm:$0xf]
        %v2150 = vld [vmem:[%s2139 + $0x3c] sm:$0xf]
        %v2151 = vld [vmem:[%s2139 + $0x40] sm:$0xf]
        %v2152 = vld [vmem:[%s2139 + $0x48] sm:$0xf]
        %v2153 = vld [vmem:[%s2139 + $0x4c] sm:$0xf]
        %v2154 = vld [vmem:[%s2139 + $0x54] sm:$0xf]
        %v2155 = vld [vmem:[%s2139 + $0x58] sm:$0xf]
        %v2172 = vunpack.c.l.b16 %v2140
        %v2173 = vunpack.c.l.b16 %v2141
        %v2174 = vunpack.c.l.b16 %v2142
        %v2175 = vunpack.c.l.b16 %v2143
        %v2176 = vunpack.c.l.b16 %v2144
        %v2177 = vunpack.c.l.b16 %v2145
        %v2178 = vunpack.c.l.b16 %v2146
        %v2179 = vunpack.c.l.b16 %v2147
        %v2180 = vunpack.c.l.b16 %v2148
        %v2181 = vunpack.c.l.b16 %v2149
        %v2182 = vunpack.c.l.b16 %v2150
        %v2183 = vunpack.c.l.b16 %v2151
        %v2184 = vunpack.c.l.b16 %v2152
        %v2185 = vunpack.c.l.b16 %v2153
        %v2186 = vunpack.c.l.b16 %v2154
        %v2187 = vunpack.c.l.b16 %v2155
        %v2188 = vpack.c.b16 %v2173, %v2172
        %v2189 = vpack.c.b16 %v2175, %v2174
        %v2190 = vpack.c.b16 %v2177, %v2176
        %v2191 = vpack.c.b16 %v2179, %v2178
        %v2192 = vpack.c.b16 %v2181, %v2180
        %v2193 = vpack.c.b16 %v2183, %v2182
        %v2194 = vpack.c.b16 %v2185, %v2184
        %v2195 = vpack.c.b16 %v2187, %v2186
        %2204 = vst.msk [vmem:[#allocation3] sm:$0xff] %vm895, %v2188
        %2205 = vst.msk [vmem:[#allocation3 + $0x8] sm:$0xff] %vm895, %v2189
        %2206 = vst.msk [vmem:[#allocation3 + $0x10] sm:$0xff] %vm895, %v2190
        %2207 = vst.msk [vmem:[#allocation3 + $0x18] sm:$0xff] %vm895, %v2191
        %2208 = vst.msk [vmem:[#allocation3 + $0x20] sm:$0xff] %vm895, %v2192
        %2209 = vst.msk [vmem:[#allocation3 + $0x28] sm:$0xff] %vm895, %v2193
        %2210 = vst.msk [vmem:[#allocation3 + $0x30] sm:$0xff] %vm895, %v2194
        %2211 = vst.msk [vmem:[#allocation3 + $0x38] sm:$0xff] %vm895, %v2195
        %v2212 = vld [vmem:[%s2139] sm:$0xf]
        %v2213 = vld [vmem:[%s2139 + $0x4] sm:$0xf]
        %v2214 = vld [vmem:[%s2139 + $0x8] sm:$0x1]
        %v2215 = vld [vmem:[%s2139 + $0xc] sm:$0xf]
        %v2216 = vld [vmem:[%s2139 + $0x10] sm:$0xf]
        %v2217 = vld [vmem:[%s2139 + $0x14] sm:$0x1]
        %v2218 = vld [vmem:[%s2139 + $0x18] sm:$0xf]
        %v2219 = vld [vmem:[%s2139 + $0x1c] sm:$0xf]
        %v2220 = vld [vmem:[%s2139 + $0x20] sm:$0x1]
        %v2221 = vld [vmem:[%s2139 + $0x24] sm:$0xf]
        %v2222 = vld [vmem:[%s2139 + $0x28] sm:$0xf]
        %v2223 = vld [vmem:[%s2139 + $0x2c] sm:$0x1]
        %v2224 = vld [vmem:[%s2139 + $0x30] sm:$0xf]
        %v2225 = vld [vmem:[%s2139 + $0x34] sm:$0xf]
        %v2226 = vld [vmem:[%s2139 + $0x38] sm:$0x1]
        %v2227 = vld [vmem:[%s2139 + $0x3c] sm:$0xf]
        %v2228 = vld [vmem:[%s2139 + $0x40] sm:$0xf]
        %v2229 = vld [vmem:[%s2139 + $0x44] sm:$0x1]
        %v2230 = vld [vmem:[%s2139 + $0x48] sm:$0xf]
        %v2231 = vld [vmem:[%s2139 + $0x4c] sm:$0xf]
        %v2232 = vld [vmem:[%s2139 + $0x50] sm:$0x1]
        %v2233 = vld [vmem:[%s2139 + $0x54] sm:$0xf]
        %v2234 = vld [vmem:[%s2139 + $0x58] sm:$0xf]
        %v2235 = vld [vmem:[%s2139 + $0x5c] sm:$0x1]
        %v2237 = vshrl.u32 %v2212, 16
        %v2239 = vrot.slane %v2237, 4
        %v2240 = vshll.u32 %v2212, 16
        %v2242 = vrot.slane %v2240, 5
        %v2243 = vor.u32 %v2239, %v2242
        %v2244 = vrot.slane %v2243, 4
        %v2246 = vshll.u32 %v2213, 16
        %v2248 = vrot.slane %v2246, 5
        %v2249 = vsel %vm930, %v2244, %v2248
        %v2250 = vshrl.u32 %v2213, 16
        %v2252 = vrot.slane %v2250, 4
        %v2253 = vor.u32 %v2252, %v2248
        %v2254 = vrot.slane %v2253, 4
        %v2256 = vshll.u32 %v2214, 16
        %v2258 = vrot.slane %v2256, 5
        %v2259 = vsel %vm930, %v2254, %v2258
        %v2261 = vshrl.u32 %v2215, 16
        %v2263 = vrot.slane %v2261, 4
        %v2264 = vshll.u32 %v2215, 16
        %v2266 = vrot.slane %v2264, 5
        %v2267 = vor.u32 %v2263, %v2266
        %v2268 = vrot.slane %v2267, 4
        %v2270 = vshll.u32 %v2216, 16
        %v2272 = vrot.slane %v2270, 5
        %v2273 = vsel %vm930, %v2268, %v2272
        %v2274 = vshrl.u32 %v2216, 16
        %v2276 = vrot.slane %v2274, 4
        %v2277 = vor.u32 %v2276, %v2272
        %v2278 = vrot.slane %v2277, 4
        %v2280 = vshll.u32 %v2217, 16
        %v2282 = vrot.slane %v2280, 5
        %v2283 = vsel %vm930, %v2278, %v2282
        %v2285 = vshrl.u32 %v2218, 16
        %v2287 = vrot.slane %v2285, 4
        %v2288 = vshll.u32 %v2218, 16
        %v2290 = vrot.slane %v2288, 5
        %v2291 = vor.u32 %v2287, %v2290
        %v2292 = vrot.slane %v2291, 4
        %v2294 = vshll.u32 %v2219, 16
        %v2296 = vrot.slane %v2294, 5
        %v2297 = vsel %vm930, %v2292, %v2296
        %v2298 = vshrl.u32 %v2219, 16
        %v2300 = vrot.slane %v2298, 4
        %v2301 = vor.u32 %v2300, %v2296
        %v2302 = vrot.slane %v2301, 4
        %v2304 = vshll.u32 %v2220, 16
        %v2306 = vrot.slane %v2304, 5
        %v2307 = vsel %vm930, %v2302, %v2306
        %v2309 = vshrl.u32 %v2221, 16
        %v2311 = vrot.slane %v2309, 4
        %v2312 = vshll.u32 %v2221, 16
        %v2314 = vrot.slane %v2312, 5
        %v2315 = vor.u32 %v2311, %v2314
        %v2316 = vrot.slane %v2315, 4
        %v2318 = vshll.u32 %v2222, 16
        %v2320 = vrot.slane %v2318, 5
        %v2321 = vsel %vm930, %v2316, %v2320
        %v2322 = vshrl.u32 %v2222, 16
        %v2324 = vrot.slane %v2322, 4
        %v2325 = vor.u32 %v2324, %v2320
        %v2326 = vrot.slane %v2325, 4
        %v2328 = vshll.u32 %v2223, 16
        %v2330 = vrot.slane %v2328, 5
        %v2331 = vsel %vm930, %v2326, %v2330
        %v2333 = vshrl.u32 %v2224, 16
        %v2335 = vrot.slane %v2333, 4
        %v2336 = vshll.u32 %v2224, 16
        %v2338 = vrot.slane %v2336, 5
        %v2339 = vor.u32 %v2335, %v2338
        %v2340 = vrot.slane %v2339, 4
        %v2342 = vshll.u32 %v2225, 16
        %v2344 = vrot.slane %v2342, 5
        %v2345 = vsel %vm930, %v2340, %v2344
        %v2346 = vshrl.u32 %v2225, 16
        %v2348 = vrot.slane %v2346, 4
        %v2349 = vor.u32 %v2348, %v2344
        %v2350 = vrot.slane %v2349, 4
        %v2352 = vshll.u32 %v2226, 16
        %v2354 = vrot.slane %v2352, 5
        %v2355 = vsel %vm930, %v2350, %v2354
        %v2357 = vshrl.u32 %v2227, 16
        %v2359 = vrot.slane %v2357, 4
        %v2360 = vshll.u32 %v2227, 16
        %v2362 = vrot.slane %v2360, 5
        %v2363 = vor.u32 %v2359, %v2362
        %v2364 = vrot.slane %v2363, 4
        %v2366 = vshll.u32 %v2228, 16
        %v2368 = vrot.slane %v2366, 5
        %v2369 = vsel %vm930, %v2364, %v2368
        %v2370 = vshrl.u32 %v2228, 16
        %v2372 = vrot.slane %v2370, 4
        %v2373 = vor.u32 %v2372, %v2368
        %v2374 = vrot.slane %v2373, 4
        %v2376 = vshll.u32 %v2229, 16
        %v2378 = vrot.slane %v2376, 5
        %v2379 = vsel %vm930, %v2374, %v2378
        %v2381 = vshrl.u32 %v2230, 16
        %v2383 = vrot.slane %v2381, 4
        %v2384 = vshll.u32 %v2230, 16
        %v2386 = vrot.slane %v2384, 5
        %v2387 = vor.u32 %v2383, %v2386
        %v2388 = vrot.slane %v2387, 4
        %v2390 = vshll.u32 %v2231, 16
        %v2392 = vrot.slane %v2390, 5
        %v2393 = vsel %vm930, %v2388, %v2392
        %v2394 = vshrl.u32 %v2231, 16
        %v2396 = vrot.slane %v2394, 4
        %v2397 = vor.u32 %v2396, %v2392
        %v2398 = vrot.slane %v2397, 4
        %v2400 = vshll.u32 %v2232, 16
        %v2402 = vrot.slane %v2400, 5
        %v2403 = vsel %vm930, %v2398, %v2402
        %v2405 = vshrl.u32 %v2233, 16
        %v2407 = vrot.slane %v2405, 4
        %v2408 = vshll.u32 %v2233, 16
        %v2410 = vrot.slane %v2408, 5
        %v2411 = vor.u32 %v2407, %v2410
        %v2412 = vrot.slane %v2411, 4
        %v2414 = vshll.u32 %v2234, 16
        %v2416 = vrot.slane %v2414, 5
        %v2417 = vsel %vm930, %v2412, %v2416
        %v2418 = vshrl.u32 %v2234, 16
        %v2420 = vrot.slane %v2418, 4
        %v2421 = vor.u32 %v2420, %v2416
        %v2422 = vrot.slane %v2421, 4
        %v2424 = vshll.u32 %v2235, 16
        %v2426 = vrot.slane %v2424, 5
        %v2427 = vsel %vm930, %v2422, %v2426
        %v2428 = vunpack.c.l.b16 %v2249
        %v2429 = vunpack.c.l.b16 %v2259
        %v2430 = vunpack.c.l.b16 %v2273
        %v2431 = vunpack.c.l.b16 %v2283
        %v2432 = vunpack.c.l.b16 %v2297
        %v2433 = vunpack.c.l.b16 %v2307
        %v2434 = vunpack.c.l.b16 %v2321
        %v2435 = vunpack.c.l.b16 %v2331
        %v2436 = vunpack.c.l.b16 %v2345
        %v2437 = vunpack.c.l.b16 %v2355
        %v2438 = vunpack.c.l.b16 %v2369
        %v2439 = vunpack.c.l.b16 %v2379
        %v2440 = vunpack.c.l.b16 %v2393
        %v2441 = vunpack.c.l.b16 %v2403
        %v2442 = vunpack.c.l.b16 %v2417
        %v2443 = vunpack.c.l.b16 %v2427
        %v2444 = vpack.c.b16 %v2429, %v2428
        %v2445 = vpack.c.b16 %v2431, %v2430
        %v2446 = vpack.c.b16 %v2433, %v2432
        %v2447 = vpack.c.b16 %v2435, %v2434
        %v2448 = vpack.c.b16 %v2437, %v2436
        %v2449 = vpack.c.b16 %v2439, %v2438
        %v2450 = vpack.c.b16 %v2441, %v2440
        %v2451 = vpack.c.b16 %v2443, %v2442
        %2452 = vrot.lane.b32.xlu0 %v2444, 8
        %v2453 = vpop.permute.xlu0 %2452
        %2454 = vrot.lane.b32.xlu0 %v2445, 8
        %v2455 = vpop.permute.xlu0 %2454
        %2456 = vrot.lane.b32.xlu0 %v2446, 8
        %v2457 = vpop.permute.xlu0 %2456
        %2458 = vrot.lane.b32.xlu0 %v2447, 8
        %v2459 = vpop.permute.xlu0 %2458
        %2460 = vrot.lane.b32.xlu0 %v2448, 8
        %v2461 = vpop.permute.xlu0 %2460
        %2462 = vrot.lane.b32.xlu0 %v2449, 8
        %v2463 = vpop.permute.xlu0 %2462
        %2464 = vrot.lane.b32.xlu0 %v2450, 8
        %v2465 = vpop.permute.xlu0 %2464
        %2466 = vrot.lane.b32.xlu0 %v2451, 8
        %v2467 = vpop.permute.xlu0 %2466
        %2476 = vst.msk [vmem:[#allocation3] sm:$0xff] %vm1171, %v2453
        %2477 = vst.msk [vmem:[#allocation3 + $0x8] sm:$0xff] %vm1171, %v2455
        %2478 = vst.msk [vmem:[#allocation3 + $0x10] sm:$0xff] %vm1171, %v2457
        %2479 = vst.msk [vmem:[#allocation3 + $0x18] sm:$0xff] %vm1171, %v2459
        %2480 = vst.msk [vmem:[#allocation3 + $0x20] sm:$0xff] %vm1171, %v2461
        %2481 = vst.msk [vmem:[#allocation3 + $0x28] sm:$0xff] %vm1171, %v2463
        %2482 = vst.msk [vmem:[#allocation3 + $0x30] sm:$0xff] %vm1171, %v2465
        %2483 = vst.msk [vmem:[#allocation3 + $0x38] sm:$0xff] %vm1171, %v2467
        %v2484 = vld [vmem:[%s2139] sm:$0xe]
        %v2485 = vld [vmem:[%s2139 + $0x4] sm:$0xf]
        %v2486 = vld [vmem:[%s2139 + $0x8] sm:$0x1]
        %v2487 = vld [vmem:[%s2139 + $0xc] sm:$0xe]
        %v2488 = vld [vmem:[%s2139 + $0x10] sm:$0xf]
        %v2489 = vld [vmem:[%s2139 + $0x14] sm:$0x1]
        %v2490 = vld [vmem:[%s2139 + $0x18] sm:$0xe]
        %v2491 = vld [vmem:[%s2139 + $0x1c] sm:$0xf]
        %v2492 = vld [vmem:[%s2139 + $0x20] sm:$0x1]
        %v2493 = vld [vmem:[%s2139 + $0x24] sm:$0xe]
        %v2494 = vld [vmem:[%s2139 + $0x28] sm:$0xf]
        %v2495 = vld [vmem:[%s2139 + $0x2c] sm:$0x1]
        %v2496 = vld [vmem:[%s2139 + $0x30] sm:$0xe]
        %v2497 = vld [vmem:[%s2139 + $0x34] sm:$0xf]
        %v2498 = vld [vmem:[%s2139 + $0x38] sm:$0x1]
        %v2499 = vld [vmem:[%s2139 + $0x3c] sm:$0xe]
        %v2500 = vld [vmem:[%s2139 + $0x40] sm:$0xf]
        %v2501 = vld [vmem:[%s2139 + $0x44] sm:$0x1]
        %v2502 = vld [vmem:[%s2139 + $0x48] sm:$0xe]
        %v2503 = vld [vmem:[%s2139 + $0x4c] sm:$0xf]
        %v2504 = vld [vmem:[%s2139 + $0x50] sm:$0x1]
        %v2505 = vld [vmem:[%s2139 + $0x54] sm:$0xe]
        %v2506 = vld [vmem:[%s2139 + $0x58] sm:$0xf]
        %v2507 = vld [vmem:[%s2139 + $0x5c] sm:$0x1]
        %v2532 = vrot.slane %v2484, 5
        %v2533 = vrot.slane %v2532, 4
        %v2534 = vrot.slane %v2485, 5
        %v2535 = vsel %vm1230, %v2533, %v2534
        %v2536 = vrot.slane %v2534, 4
        %v2537 = vrot.slane %v2486, 5
        %v2538 = vsel %vm1230, %v2536, %v2537
        %v2539 = vrot.slane %v2487, 5
        %v2540 = vrot.slane %v2539, 4
        %v2541 = vrot.slane %v2488, 5
        %v2542 = vsel %vm1230, %v2540, %v2541
        %v2543 = vrot.slane %v2541, 4
        %v2544 = vrot.slane %v2489, 5
        %v2545 = vsel %vm1230, %v2543, %v2544
        %v2546 = vrot.slane %v2490, 5
        %v2547 = vrot.slane %v2546, 4
        %v2548 = vrot.slane %v2491, 5
        %v2549 = vsel %vm1230, %v2547, %v2548
        %v2550 = vrot.slane %v2548, 4
        %v2551 = vrot.slane %v2492, 5
        %v2552 = vsel %vm1230, %v2550, %v2551
        %v2553 = vrot.slane %v2493, 5
        %v2554 = vrot.slane %v2553, 4
        %v2555 = vrot.slane %v2494, 5
        %v2556 = vsel %vm1230, %v2554, %v2555
        %v2557 = vrot.slane %v2555, 4
        %v2558 = vrot.slane %v2495, 5
        %v2559 = vsel %vm1230, %v2557, %v2558
        %v2560 = vrot.slane %v2496, 5
        %v2561 = vrot.slane %v2560, 4
        %v2562 = vrot.slane %v2497, 5
        %v2563 = vsel %vm1230, %v2561, %v2562
        %v2564 = vrot.slane %v2562, 4
        %v2565 = vrot.slane %v2498, 5
        %v2566 = vsel %vm1230, %v2564, %v2565
        %v2567 = vrot.slane %v2499, 5
        %v2568 = vrot.slane %v2567, 4
        %v2569 = vrot.slane %v2500, 5
        %v2570 = vsel %vm1230, %v2568, %v2569
        %v2571 = vrot.slane %v2569, 4
        %v2572 = vrot.slane %v2501, 5
        %v2573 = vsel %vm1230, %v2571, %v2572
        %v2574 = vrot.slane %v2502, 5
        %v2575 = vrot.slane %v2574, 4
        %v2576 = vrot.slane %v2503, 5
        %v2577 = vsel %vm1230, %v2575, %v2576
        %v2578 = vrot.slane %v2576, 4
        %v2579 = vrot.slane %v2504, 5
        %v2580 = vsel %vm1230, %v2578, %v2579
        %v2581 = vrot.slane %v2505, 5
        %v2582 = vrot.slane %v2581, 4
        %v2583 = vrot.slane %v2506, 5
        %v2584 = vsel %vm1230, %v2582, %v2583
        %v2585 = vrot.slane %v2583, 4
        %v2586 = vrot.slane %v2507, 5
        %v2587 = vsel %vm1230, %v2585, %v2586
        %v2588 = vunpack.c.l.b16 %v2535
        %v2589 = vunpack.c.l.b16 %v2538
        %v2590 = vunpack.c.l.b16 %v2542
        %v2591 = vunpack.c.l.b16 %v2545
        %v2592 = vunpack.c.l.b16 %v2549
        %v2593 = vunpack.c.l.b16 %v2552
        %v2594 = vunpack.c.l.b16 %v2556
        %v2595 = vunpack.c.l.b16 %v2559
        %v2596 = vunpack.c.l.b16 %v2563
        %v2597 = vunpack.c.l.b16 %v2566
        %v2598 = vunpack.c.l.b16 %v2570
        %v2599 = vunpack.c.l.b16 %v2573
        %v2600 = vunpack.c.l.b16 %v2577
        %v2601 = vunpack.c.l.b16 %v2580
        %v2602 = vunpack.c.l.b16 %v2584
        %v2603 = vunpack.c.l.b16 %v2587
        %v2604 = vpack.c.b16 %v2589, %v2588
        %v2605 = vpack.c.b16 %v2591, %v2590
        %v2606 = vpack.c.b16 %v2593, %v2592
        %v2607 = vpack.c.b16 %v2595, %v2594
        %v2608 = vpack.c.b16 %v2597, %v2596
        %v2609 = vpack.c.b16 %v2599, %v2598
        %v2610 = vpack.c.b16 %v2601, %v2600
        %v2611 = vpack.c.b16 %v2603, %v2602
        %2612 = vrot.lane.b32.xlu0 %v2604, 16
        %v2613 = vpop.permute.xlu0 %2612
        %2614 = vrot.lane.b32.xlu0 %v2605, 16
        %v2615 = vpop.permute.xlu0 %2614
        %2616 = vrot.lane.b32.xlu0 %v2606, 16
        %v2617 = vpop.permute.xlu0 %2616
        %2618 = vrot.lane.b32.xlu0 %v2607, 16
        %v2619 = vpop.permute.xlu0 %2618
        %2620 = vrot.lane.b32.xlu0 %v2608, 16
        %v2621 = vpop.permute.xlu0 %2620
        %2622 = vrot.lane.b32.xlu0 %v2609, 16
        %v2623 = vpop.permute.xlu0 %2622
        %2624 = vrot.lane.b32.xlu0 %v2610, 16
        %v2625 = vpop.permute.xlu0 %2624
        %2626 = vrot.lane.b32.xlu0 %v2611, 16
        %v2627 = vpop.permute.xlu0 %2626
        %2636 = vst.msk [vmem:[#allocation3] sm:$0xff] %vm1335, %v2613
        %2637 = vst.msk [vmem:[#allocation3 + $0x8] sm:$0xff] %vm1335, %v2615
        %2638 = vst.msk [vmem:[#allocation3 + $0x10] sm:$0xff] %vm1335, %v2617
        %2639 = vst.msk [vmem:[#allocation3 + $0x18] sm:$0xff] %vm1335, %v2619
        %2640 = vst.msk [vmem:[#allocation3 + $0x20] sm:$0xff] %vm1335, %v2621
        %2641 = vst.msk [vmem:[#allocation3 + $0x28] sm:$0xff] %vm1335, %v2623
        %2642 = vst.msk [vmem:[#allocation3 + $0x30] sm:$0xff] %vm1335, %v2625
        %2643 = vst.msk [vmem:[#allocation3 + $0x38] sm:$0xff] %vm1335, %v2627
        %v2644 = vld [vmem:[#allocation3] sm:$0xff]
        %v2645 = vld [vmem:[#allocation3 + $0x8] sm:$0xff]
        %v2646 = vld [vmem:[#allocation3 + $0x10] sm:$0xff]
        %v2647 = vld [vmem:[#allocation3 + $0x18] sm:$0xff]
        %v2648 = vld [vmem:[#allocation3 + $0x20] sm:$0xff]
        %v2649 = vld [vmem:[#allocation3 + $0x28] sm:$0xff]
        %v2650 = vld [vmem:[#allocation3 + $0x30] sm:$0xff]
        %v2651 = vld [vmem:[#allocation3 + $0x38] sm:$0xff]
        %s2652 = scalar_lea.vmem %s5, 24
        %v2653 = vld [vmem:[%s2652] sm:$0xf]
        %v2654 = vld [vmem:[%s2652 + $0x4] sm:$0xf]
        %v2655 = vld [vmem:[%s2652 + $0x8] sm:$0xf]
        %v2659 = vunpack.c.l.b16 %v2653
        %v2660 = vunpack.c.l.b16 %v2654
        %v2661 = vunpack.c.l.b16 %v2655
        %v2662 = vpack.c.b16 %v2660, %v2659
        %v2663 = vpack.c.b16 %v2661, %v2661
        %v2666 = vsel %vm1880, %v2644, 0
        %v2669 = vsel %vm1880, %v2645, 0
        %v2672 = vsel %vm1880, %v2646, 0
        %v2675 = vsel %vm1880, %v2647, 0
        %v2678 = vsel %vm1880, %v2648, 0
        %v2681 = vsel %vm1880, %v2649, 0
        %v2684 = vsel %vm1880, %v2650, 0
        %v2687 = vsel %vm1880, %v2651, 0
        %v2690 = vsel %vm1905, %v2663, 0
        %2692 = vmatprep.subr.bf16.mxu0 0
        %2693 = vmatpush1.bf16.msra.mxu0 %v2662
        %2694 = vmatprep.subr.bf16.mxu0 0
        %2695 = vmatpush1.bf16.msra.mxu0 %v2690
        %2696 = vmatprep.subr.bf16.mxu0 0
        %2697 = vmatpush1.bf16.msra.mxu0 0
        %2698 = vmatprep.subr.bf16.mxu0 0
        %2699 = vmatpush1.bf16.msra.mxu0 0
        %2700 = vmatprep.subr.bf16.mxu0 0
        %2701 = vmatpush1.bf16.msra.mxu0 0
        %2702 = vmatprep.subr.bf16.mxu0 0
        %2703 = vmatpush1.bf16.msra.mxu0 0
        %2704 = vmatprep.subr.bf16.mxu0 0
        %2705 = vmatpush1.bf16.msra.mxu0 0
        %2706 = vmatprep.subr.bf16.mxu0 0
        %2707 = vmatpush1.bf16.msra.mxu0 0
        %2708 = vmatprep.subr.bf16.mxu0 0
        %2709 = vmatpush1.bf16.msra.mxu0 0
        %2710 = vmatprep.subr.bf16.mxu0 0
        %2711 = vmatpush1.bf16.msra.mxu0 0
        %2712 = vmatprep.subr.bf16.mxu0 0
        %2713 = vmatpush1.bf16.msra.mxu0 0
        %2714 = vmatprep.subr.bf16.mxu0 0
        %2715 = vmatpush1.bf16.msra.mxu0 0
        %2716 = vmatprep.subr.bf16.mxu0 0
        %2717 = vmatpush1.bf16.msra.mxu0 0
        %2718 = vmatprep.subr.bf16.mxu0 0
        %2719 = vmatpush1.bf16.msra.mxu0 0
        %2720 = vmatprep.subr.bf16.mxu0 0
        %2721 = vmatpush1.bf16.msra.mxu0 0
        %2722 = vmatprep.subr.bf16.mxu0 0
        %2723 = vmatpush1.bf16.msra.mxu0 0
        %2724 = vmatprep.mubr.bf16.mxu0 0
        %2725 = vmatmul.mubr.bf16.gmra.mrb[0].mxu0 %v2666
        %v2726 = vpop.f32.mrb[0].mxu0
        %v2727 = vadd.f32 0.0, %v2726
        %v2728 = vpop.f32.mrb[0].mxu0
        %v2729 = vpop.f32.mrb[0].mxu0
        %v2730 = vadd.f32 0.0, %v2729
        %v2731 = vpop.f32.mrb[0].mxu0
        %2732 = vmatprep.mubr.bf16.mxu0 0
        %2733 = vmatmul.mubr.bf16.gmra.mrb[0].mxu0 %v2669
        %v2734 = vpop.f32.mrb[0].mxu0
        %v2735 = vadd.f32 0.0, %v2734
        %v2736 = vpop.f32.mrb[0].mxu0
        %v2737 = vpop.f32.mrb[0].mxu0
        %v2738 = vadd.f32 0.0, %v2737
        %v2739 = vpop.f32.mrb[0].mxu0
        %2740 = vmatprep.mubr.bf16.mxu0 0
        %2741 = vmatmul.mubr.bf16.gmra.mrb[0].mxu0 %v2672
        %v2742 = vpop.f32.mrb[0].mxu0
        %v2743 = vadd.f32 0.0, %v2742
        %v2744 = vpop.f32.mrb[0].mxu0
        %v2745 = vpop.f32.mrb[0].mxu0
        %v2746 = vadd.f32 0.0, %v2745
        %v2747 = vpop.f32.mrb[0].mxu0
        %2748 = vmatprep.mubr.bf16.mxu0 0
        %2749 = vmatmul.mubr.bf16.gmra.mrb[0].mxu0 %v2675
        %v2750 = vpop.f32.mrb[0].mxu0
        %v2751 = vadd.f32 0.0, %v2750
        %v2752 = vpop.f32.mrb[0].mxu0
        %v2753 = vpop.f32.mrb[0].mxu0
        %v2754 = vadd.f32 0.0, %v2753
        %v2755 = vpop.f32.mrb[0].mxu0
        %2756 = vmatprep.mubr.bf16.mxu0 0
        %2757 = vmatmul.mubr.bf16.gmra.mrb[0].mxu0 %v2678
        %v2758 = vpop.f32.mrb[0].mxu0
        %v2759 = vadd.f32 0.0, %v2758
        %v2760 = vpop.f32.mrb[0].mxu0
        %v2761 = vpop.f32.mrb[0].mxu0
        %v2762 = vadd.f32 0.0, %v2761
        %v2763 = vpop.f32.mrb[0].mxu0
        %2764 = vmatprep.mubr.bf16.mxu0 0
        %2765 = vmatmul.mubr.bf16.gmra.mrb[0].mxu0 %v2681
        %v2766 = vpop.f32.mrb[0].mxu0
        %v2767 = vadd.f32 0.0, %v2766
        %v2768 = vpop.f32.mrb[0].mxu0
        %v2769 = vpop.f32.mrb[0].mxu0
        %v2770 = vadd.f32 0.0, %v2769
        %v2771 = vpop.f32.mrb[0].mxu0
        %2772 = vmatprep.mubr.bf16.mxu0 0
        %2773 = vmatmul.mubr.bf16.gmra.mrb[0].mxu0 %v2684
        %v2774 = vpop.f32.mrb[0].mxu0
        %v2775 = vadd.f32 0.0, %v2774
        %v2776 = vpop.f32.mrb[0].mxu0
        %v2777 = vpop.f32.mrb[0].mxu0
        %v2778 = vadd.f32 0.0, %v2777
        %v2779 = vpop.f32.mrb[0].mxu0
        %2780 = vmatprep.mubr.bf16.mxu0 0
        %2781 = vmatmul.mubr.bf16.gmra.mrb[0].mxu0 %v2687
        %v2782 = vpop.f32.mrb[0].mxu0
        %v2783 = vadd.f32 0.0, %v2782
        %v2784 = vpop.f32.mrb[0].mxu0
        %v2785 = vpop.f32.mrb[0].mxu0
        %v2786 = vadd.f32 0.0, %v2785
        %v2787 = vpop.f32.mrb[0].mxu0
        %2788 = vdwg.mxu0
        %v2789 = vadd.f32 %v2077, %v2727
        %v2790 = vadd.f32 %v2080, %v2730
        %v2791 = vadd.f32 %v2085, %v2735
        %v2792 = vadd.f32 %v2088, %v2738
        %v2793 = vadd.f32 %v2093, %v2743
        %v2794 = vadd.f32 %v2096, %v2746
        %v2795 = vadd.f32 %v2101, %v2751
        %v2796 = vadd.f32 %v2104, %v2754
        %v2797 = vadd.f32 %v2109, %v2759
        %v2798 = vadd.f32 %v2112, %v2762
        %v2799 = vadd.f32 %v2117, %v2767
        %v2800 = vadd.f32 %v2120, %v2770
        %v2801 = vadd.f32 %v2125, %v2775
        %v2802 = vadd.f32 %v2128, %v2778
        %v2803 = vadd.f32 %v2133, %v2783
        %v2804 = vadd.f32 %v2136, %v2786
        // Predicated region
        $region53: #{tpu_custom_call.1} parent=43 // pred_check
          %p2805 = pneg %p809
        $region54: #{tpu_custom_call.1} parent=43 // pred_check_branch
          %2807 = sbr.rel (%p2805) target = $region56
        $region55: #{tpu_custom_call.1} parent=43 // pred_region
          %2808 = vst [vmem:[%s399] sm:$0x3] 0.0
        $region56: #{tpu_custom_call.1} parent=43 // pred_fallthru
          _
        %v2809 = vadd.f32 %v2789, %v2790
        %v2810 = vadd.f32 %v2809, %v2791
        %v2811 = vadd.f32 %v2810, %v2792
        %v2812 = vadd.f32 %v2811, %v2793
        %v2813 = vadd.f32 %v2812, %v2794
        %v2814 = vadd.f32 %v2813, %v2795
        %v2815 = vadd.f32 %v2814, %v2796
        %v2816 = vadd.f32 %v2815, %v2797
        %v2817 = vadd.f32 %v2816, %v2798
        %v2818 = vadd.f32 %v2817, %v2799
        %v2819 = vadd.f32 %v2818, %v2800
        %v2820 = vadd.f32 %v2819, %v2801
        %v2821 = vadd.f32 %v2820, %v2802
        %v2822 = vadd.f32 %v2821, %v2803
        %v2823 = vadd.f32 %v2822, %v2804
        %v2824 = vrot.slane %v2823, 4
        %v2825 = vadd.f32 %v2823, %v2824
        %v2826 = vrot.slane %v2825, 2
        %v2827 = vadd.f32 %v2825, %v2826
        %v2828 = vrot.slane %v2827, 1
        %v2829 = vadd.f32 %v2827, %v2828
        %v2830 = vmul.f32 %v2789, %v2789
        %v2831 = vmul.f32 %v2790, %v2790
        %v2832 = vmul.f32 %v2791, %v2791
        %v2833 = vmul.f32 %v2792, %v2792
        %v2834 = vmul.f32 %v2793, %v2793
        %v2835 = vmul.f32 %v2794, %v2794
        %v2836 = vmul.f32 %v2795, %v2795
        %v2837 = vmul.f32 %v2796, %v2796
        %v2838 = vmul.f32 %v2797, %v2797
        %v2839 = vmul.f32 %v2798, %v2798
        %v2840 = vmul.f32 %v2799, %v2799
        %v2841 = vmul.f32 %v2800, %v2800
        %v2842 = vmul.f32 %v2801, %v2801
        %v2843 = vmul.f32 %v2802, %v2802
        %v2844 = vmul.f32 %v2803, %v2803
        %v2845 = vmul.f32 %v2804, %v2804
        %v2846 = vadd.f32 %v2830, %v2831
        %v2847 = vadd.f32 %v2846, %v2832
        %v2848 = vadd.f32 %v2847, %v2833
        %v2849 = vadd.f32 %v2848, %v2834
        %v2850 = vadd.f32 %v2849, %v2835
        %v2851 = vadd.f32 %v2850, %v2836
        %v2852 = vadd.f32 %v2851, %v2837
        %v2853 = vadd.f32 %v2852, %v2838
        %v2854 = vadd.f32 %v2853, %v2839
        %v2855 = vadd.f32 %v2854, %v2840
        %v2856 = vadd.f32 %v2855, %v2841
        %v2857 = vadd.f32 %v2856, %v2842
        %v2858 = vadd.f32 %v2857, %v2843
        %v2859 = vadd.f32 %v2858, %v2844
        %v2860 = vadd.f32 %v2859, %v2845
        %v2861 = vrot.slane %v2860, 4
        %v2862 = vadd.f32 %v2860, %v2861
        %v2863 = vrot.slane %v2862, 2
        %v2864 = vadd.f32 %v2862, %v2863
        %v2865 = vrot.slane %v2864, 1
        %v2866 = vadd.f32 %v2864, %v2865
        %v2867 = vld [vmem:[%s399] sm:$0x1]
        %v2868 = vadd.f32 %v2867, %v2829
        %2869 = vst [vmem:[%s399] sm:$0x1] %v2868
        %v2870 = vld [vmem:[%s399 + $0x1] sm:$0x1]
        %v2871 = vadd.f32 %v2870, %v2866
        %2872 = vst [vmem:[%s399 + $0x1] sm:$0x1] %v2871
        %v2873 = vpack.c.bf16 %v2790, %v2789
        %v2874 = vpack.c.bf16 %v2792, %v2791
        %v2875 = vpack.c.bf16 %v2794, %v2793
        %v2876 = vpack.c.bf16 %v2796, %v2795
        %v2877 = vpack.c.bf16 %v2798, %v2797
        %v2878 = vpack.c.bf16 %v2800, %v2799
        %v2879 = vpack.c.bf16 %v2802, %v2801
        %v2880 = vpack.c.bf16 %v2804, %v2803
        %v2889 = vunpack.c.l.b16 %v2873
        %v2890 = vunpack.c.h.b16 %v2873
        %v2891 = vunpack.c.l.b16 %v2874
        %v2892 = vunpack.c.h.b16 %v2874
        %v2893 = vunpack.c.l.b16 %v2875
        %v2894 = vunpack.c.h.b16 %v2875
        %v2895 = vunpack.c.l.b16 %v2876
        %v2896 = vunpack.c.h.b16 %v2876
        %v2897 = vunpack.c.l.b16 %v2877
        %v2898 = vunpack.c.h.b16 %v2877
        %v2899 = vunpack.c.l.b16 %v2878
        %v2900 = vunpack.c.h.b16 %v2878
        %v2901 = vunpack.c.l.b16 %v2879
        %v2902 = vunpack.c.h.b16 %v2879
        %v2903 = vunpack.c.l.b16 %v2880
        %v2904 = vunpack.c.h.b16 %v2880
        %v2905 = vpack.c.b16 %v2889, %v2889
        %v2906 = vpack.c.b16 %v2890, %v2890
        %v2907 = vpack.c.b16 %v2891, %v2891
        %v2908 = vpack.c.b16 %v2892, %v2892
        %v2909 = vpack.c.b16 %v2893, %v2893
        %v2910 = vpack.c.b16 %v2894, %v2894
        %v2911 = vpack.c.b16 %v2895, %v2895
        %v2912 = vpack.c.b16 %v2896, %v2896
        %v2913 = vpack.c.b16 %v2897, %v2897
        %v2914 = vpack.c.b16 %v2898, %v2898
        %v2915 = vpack.c.b16 %v2899, %v2899
        %v2916 = vpack.c.b16 %v2900, %v2900
        %v2917 = vpack.c.b16 %v2901, %v2901
        %v2918 = vpack.c.b16 %v2902, %v2902
        %v2919 = vpack.c.b16 %v2903, %v2903
        %v2920 = vpack.c.b16 %v2904, %v2904
        %2937 = vst [vmem:[%s392] sm:$0xf] %v2905
        %2938 = vst [vmem:[%s392 + $0x4] sm:$0xf] %v2906
        %2939 = vst [vmem:[%s392 + $0x8] sm:$0xf] %v2907
        %2940 = vst [vmem:[%s392 + $0xc] sm:$0xf] %v2908
        %2941 = vst [vmem:[%s392 + $0x10] sm:$0xf] %v2909
        %2942 = vst [vmem:[%s392 + $0x14] sm:$0xf] %v2910
        %2943 = vst [vmem:[%s392 + $0x18] sm:$0xf] %v2911
        %2944 = vst [vmem:[%s392 + $0x1c] sm:$0xf] %v2912
        %2945 = vst [vmem:[%s392 + $0x20] sm:$0xf] %v2913
        %2946 = vst [vmem:[%s392 + $0x24] sm:$0xf] %v2914
        %2947 = vst [vmem:[%s392 + $0x28] sm:$0xf] %v2915
        %2948 = vst [vmem:[%s392 + $0x2c] sm:$0xf] %v2916
        %2949 = vst [vmem:[%s392 + $0x30] sm:$0xf] %v2917
        %2950 = vst [vmem:[%s392 + $0x34] sm:$0xf] %v2918
        %2951 = vst [vmem:[%s392 + $0x38] sm:$0xf] %v2919
        %2952 = vst [vmem:[%s392 + $0x3c] sm:$0xf] %v2920
        %s2953 = sand.u32 %s210, 1
        %s2954 = scalar_lea.sflag [#allocation5], %s2953
        %s2955 = sand.u32 %s210, 1
        %s2956 = smul.addr %s2955, 64
        %s2957 = scalar_lea.vmem [#allocation4], %s2956
        %s2958 = sand.u32 %s236, 1
        %s2959 = scalar_lea.sflag [#allocation7], %s2958
        %s2960 = sand.u32 %s236, 1
        %s2961 = smul.addr %s2960, 2
        %s2962 = scalar_lea.vmem [#allocation6], %s2961
        // Predicated region
        $region57: #{tpu_custom_call.1} parent=43 // pred_check
          %p2963 = pneg %p220
        $region58: #{tpu_custom_call.1} parent=43 // pred_check_branch
          %2965 = sbr.rel (%p2963) target = $region60
        $region59: #{tpu_custom_call.1} parent=43 // pred_region
          %s2966 = smul.u32 8, %s30
          %s2968 = ssub.s32 1024, 1024
          %2969 = vsyncadd %s2954, %s2968
          %s2970 = smul.addr %s2966, 2
          %s2971 = smul.addr %s29, 32
          %s2972 = sadd.s32 %s2970, %s2971
          %s2973 = smul.addr %s2972, 64
          %s2974 = scalar_lea.hbm %s6, %s2973
          %s2975 = sshll.u32 %s2957, 4
          %s2976 = int_to_ptr.vmem [resolvable:$true] %s2975
          %2981 = dma.vmem_to_hbm [thread:$0]  %s2976, 1024, %s2974, %s2954, 64, 64, 4
        $region60: #{tpu_custom_call.1} parent=43 // pred_fallthru
          _
        // Predicated region
        $region61: #{tpu_custom_call.1} parent=43 // pred_check
          %p2982 = pneg %p246
        $region62: #{tpu_custom_call.1} parent=43 // pred_check_branch
          %2984 = sbr.rel (%p2982) target = $region64
        $region63: #{tpu_custom_call.1} parent=43 // pred_region
          %s2986 = ssub.s32 32, 32
          %2987 = vsyncadd %s2959, %s2986
          %s2988 = smul.addr %s29, 32
          %s2989 = scalar_lea.hbm %s7, %s2988
          %s2991 = sshll.u32 %s2962, 4
          %s2992 = int_to_ptr.vmem [resolvable:$true] %s2991
          %2994 = dma.vmem_to_hbm [thread:$0]  %s2992, 32, %s2989, %s2959
        $region64: #{tpu_custom_call.1} parent=43 // pred_fallthru
          _
      $region44: #{tpu_custom_call.1} parent=5 // pred_fallthru
        _
      %p2995 = scmp.le.s32.totalorder 2, %s20
      // Predicated region
      $region65: #{tpu_custom_call.1} parent=5 // pred_check
        %p2996 = pneg %p2995
      $region66: #{tpu_custom_call.1} parent=5 // pred_check_branch
        %2998 = sbr.rel (%p2996) target = $region68
      $region67: #{tpu_custom_call.1} parent=5 // pred_region
        %s2999 = ssub.s32 %s20, 2
        // Predicated region
        $region69: #{tpu_custom_call.1} parent=67 // pred_check
          %p3000 = pneg %p226
        $region70: #{tpu_custom_call.1} parent=67 // pred_check_branch
          %3002 = sbr.rel (%p3000) target = $region72
        $region71: #{tpu_custom_call.1} parent=67 // pred_region
          %s3003 = sand.u32 %s211, 1
          %s3004 = scalar_lea.sflag [#allocation5], %s3003
          %s3005 = sand.u32 %s211, 1
          %s3006 = smul.addr %s3005, 64
          %s3007 = scalar_lea.vmem [#allocation4], %s3006
          %3008 = dma.done %s3004, 1024
        $region72: #{tpu_custom_call.1} parent=67 // pred_fallthru
          _
        // Predicated region
        $region73: #{tpu_custom_call.1} parent=67 // pred_check
          %p3009 = pneg %p252
        $region74: #{tpu_custom_call.1} parent=67 // pred_check_branch
          %3011 = sbr.rel (%p3009) target = $region76
        $region75: #{tpu_custom_call.1} parent=67 // pred_region
          %s3012 = sand.u32 %s237, 1
          %s3013 = scalar_lea.sflag [#allocation7], %s3012
          %s3014 = sand.u32 %s237, 1
          %s3015 = smul.addr %s3014, 2
          %s3016 = scalar_lea.vmem [#allocation6], %s3015
          %3017 = dma.done %s3013, 32
        $region76: #{tpu_custom_call.1} parent=67 // pred_fallthru
          _
      $region68: #{tpu_custom_call.1} parent=5 // pred_fallthru
        _
    $region6: #{tpu_custom_call.1} parent=1 // loop_footer
      %s24 = sadd.s32 1, %s20
    $region7: #{tpu_custom_call.1} parent=1 // loop_footer_branch
      %19 = sbr.rel target = $region3
    $region8: #{tpu_custom_call.1} parent=1 // loop_exit
      _
    %3018 = vsyncpa [#allocation5], 1
    %s3019 = scalar_lea.sflag [#allocation5], 1
    %3020 = vsyncpa %s3019, 1
    %3021 = vsyncpa [#allocation7], 1
    %s3022 = scalar_lea.sflag [#allocation7], 1
    %3023 = vsyncpa %s3022, 1

</llo_original>
